<compile_context>
chip_gen: v7x
topology: tpu7x:2x2x1
jax: 0.10.0
libtpu: 0.0.40
codegen_flags: <defaults>
</compile_context>

<pallas_src>
import jax
import jax.numpy as jnp
from jax.experimental import pallas as pl
from jax.experimental.pallas import tpu as pltpu

BN_EPS = 1e-5


# ----------------------------------------------------------------------------
# Fused whole-network kernel (all Bpb batch items of this grid step)
# ----------------------------------------------------------------------------
def _make_fused_kernel(H, K, Lin, Bpb, OUTW):
    pad = (K - 1) // 2
    NEG = float("-inf")

    def affine(a, cp):
        # cp: [H, 3+K] columns = (conv bias, bn scale, bn shift, [extra w])
        a = a + cp[:, 0:1]                       # conv bias
        a = jnp.maximum(a, 0.0)                  # ReLU
        return a * cp[:, 1:2] + cp[:, 2:3]       # BatchNorm (inference affine)

    def maxpool(a):
        # MaxPool1d(kernel=K, stride=1, padding=pad) with -inf border,
        # entirely in registers (no VMEM scratch round trip).
        if pad == 0:
            return a
        Lc = a.shape[1]
        negp = jnp.full((H, pad), NEG, jnp.float32)
        ap = jnp.concatenate([negp, a, negp], axis=1)      # (H, Lc + 2*pad)
        p = a                                              # center window
        for k in range(K):
            if k == pad:
                continue
            p = jnp.maximum(p, ap[:, k:k + Lc])
        return p

    def zpad(a):
        # Zero padding by K-1 on both sides (ConvTranspose == valid conv over
        # a zero-padded input with flipped/transposed weights) — in registers.
        if K == 1:
            return a
        z = jnp.zeros((H, K - 1), jnp.float32)
        return jnp.concatenate([z, a, z], axis=1)

    def kernel(x_ref, w_hh_ref, cp_ref, clsw_ref, out_ref):
        x2d = x_ref[0]                             # (Bpb, Lin)
        cls_w = clsw_ref[...]                      # (H, 163)
        # Hoist all tiny parameter loads out of the per-item loop.
        cp = [cp_ref[i] for i in range(7)]         # each (H, 3+K)
        wh = [w_hh_ref[i] for i in range(4)]       # each (H, K*H)
        cls_b = cp[6][0:1, 0:1]                    # classifier bias (1,1)

        rows = []
        for b in range(Bpb):                       # static unroll (Bpb small)
            x_row = x2d[b:b + 1, :]                # (1, Lin)

            # -------- encoder layer 1 (Cin=1): VPU outer products --------
            cp0 = cp[0]
            w0 = cp0[:, 3:3 + K]                   # (H, K)
            L1 = Lin - (K - 1)
            acc = w0[:, 0:1] * x_row[:, 0:L1]
            for k in range(1, K):
                acc = acc + w0[:, k:k + 1] * x_row[:, k:k + L1]
            h = maxpool(affine(acc, cp0))
            Lc = L1

            # -------- encoder layers 2,3 (HxH): collapsed MXU contraction ----
            for li in (1, 2):
                Lout = Lc - (K - 1)
                rhs = jnp.concatenate([h[:, k:k + Lout] for k in range(K)],
                                      axis=0)      # (K*H, Lout)
                acc = jnp.dot(wh[li - 1], rhs,
                              preferred_element_type=jnp.float32)
                h = maxpool(affine(acc, cp[li]))
                Lc = Lout
            # h == encoded: (H, 163)

            # -------- classifier (fused) --------
            s = jnp.sum(h * cls_w, axis=1, keepdims=True)     # (H, 1)
            pred = jnp.sum(s, axis=0, keepdims=True) + cls_b  # (1, 1)

            # -------- decoder layers 1,2 (HxH ConvTranspose) --------
            for li in range(2):
                Lout = Lc + (K - 1)
                hp = zpad(h)
                rhs = jnp.concatenate([hp[:, k:k + Lout] for k in range(K)],
                                      axis=0)
                acc = jnp.dot(wh[2 + li], rhs,
                              preferred_element_type=jnp.float32)
                h = affine(acc, cp[3 + li])
                Lc = Lout

            # -------- decoder layer 3 (Cout=1): VPU + sublane reduce --------
            Lout = Lc + (K - 1)
            cp5 = cp[5]
            w3 = cp5[:, 3:3 + K]                   # (H, K), pre-flipped
            hp = zpad(h)
            acc = w3[:, 0:1] * hp[:, 0:Lout]
            for k in range(1, K):
                acc = acc + w3[:, k:k + 1] * hp[:, k:k + Lout]
            dec = jnp.sum(acc, axis=0, keepdims=True)          # (1, Lout)
            dec = jnp.maximum(dec + cp5[0:1, 0:1], 0.0)
            dec = dec * cp5[0:1, 1:2] + cp5[0:1, 2:3]

            # -------- pack this item's lane-dense output row --------
            pieces = [dec]
            gap = OUTW - Lin - 1
            if gap > 0:
                pieces.append(jnp.zeros((1, gap), jnp.float32))
            pieces.append(pred)                    # pred lives in the last lane
            rows.append(jnp.concatenate(pieces, axis=1))

        # Single lane-dense store for decoded + pred of all Bpb items.
        out_ref[0] = jnp.concatenate(rows, axis=0)

    return kernel


# ----------------------------------------------------------------------------
# Host-side parameter packing (done once; cacheable / constant-folded under jit)
# ----------------------------------------------------------------------------
def _bn_scale_shift(layer):
    scale = layer["gamma"] / jnp.sqrt(layer["var"] + BN_EPS)
    shift = layer["beta"] - layer["mean"] * scale
    return scale, shift


def pack_params(params, *, K):
    H = params["encoder"][0]["w"].shape[0]

    # Per-output-channel scalars: [7, H, 3+K]
    #   slots 0..2: encoder layers (slot 0 also carries the Cin=1 weights)
    #   slots 3..4: decoder layers 1,2
    #   slot 5:     decoder layer 3 (row 0 scalars + flipped [H,K] weights)
    #   slot 6:     classifier bias at [0,0]
    cps = []
    for i, layer in enumerate(params["encoder"]):
        scale, shift = _bn_scale_shift(layer)
        cp = jnp.zeros((H, 3 + K), jnp.float32)
        cp = cp.at[:, 0].set(layer["b"]).at[:, 1].set(scale).at[:, 2].set(shift)
        if i == 0:
            cp = cp.at[:, 3:3 + K].set(layer["w"][:, 0, :])      # [H, K], Cin=1
        cps.append(cp)
    for layer in params["decoder"][:2]:                          # Cout = H
        scale, shift = _bn_scale_shift(layer)
        cp = jnp.zeros((H, 3 + K), jnp.float32)
        cp = cp.at[:, 0].set(layer["b"]).at[:, 1].set(scale).at[:, 2].set(shift)
        cps.append(cp)
    layer = params["decoder"][2]                                 # Cout = 1
    scale, shift = _bn_scale_shift(layer)
    cp = jnp.zeros((H, 3 + K), jnp.float32)
    cp = cp.at[0, 0].set(layer["b"][0]).at[0, 1].set(scale[0]).at[0, 2].set(shift[0])
    cp = cp.at[:, 3:3 + K].set(layer["w"][:, 0, ::-1])           # flipped, [H, K]
    cps.append(cp)
    cpb = jnp.zeros((H, 3 + K), jnp.float32).at[0, 0].set(params["cls_b"][0])
    cps.append(cpb)
    chan_params = jnp.stack(cps, axis=0)                          # [7, H, 3+K]

    # H-input, H-output conv weights flattened k-major to [H, K*H].
    whs = []
    for layer in params["encoder"][1:]:
        w = layer["w"]                                            # [H, H, K]
        whs.append(jnp.transpose(w, (0, 2, 1)).reshape(H, K * H))
    for layer in params["decoder"][:2]:
        w_t = layer["w"]                                          # [Cin=H, Cout=H, K]
        whs.append(jnp.transpose(w_t[:, :, ::-1], (1, 2, 0)).reshape(H, K * H))
    w_hh = jnp.stack(whs, axis=0)                                 # [4, H, K*H]

    cls_w = params["cls_w"].reshape(H, -1)                        # [H, 163]
    return w_hh, chan_params, cls_w


# ----------------------------------------------------------------------------
# Forward pass
# ----------------------------------------------------------------------------
def conv_autoencoder_forward(x, params, *, K, grid_blocks=1):
    """grid_blocks=1 (default): single grid step, batch folded in-kernel —
    best on the single-TensorCore v5e/v6e.  On v7x, pass grid_blocks=2 to put
    one batch block per TensorCore ('parallel' grid axis)."""
    B, L = x.shape
    H = params["encoder"][0]["w"].shape[0]
    Lcf = L - 3 * (K - 1)
    assert Lcf * H == params["cls_w"].shape[1], (
        "input length inconsistent with the module's hardcoded hidden_dim*163 flatten")
    assert B % grid_blocks == 0
    G = grid_blocks
    Bpb = B // G

    w_hh, chan_params, cls_w = pack_params(params, K=K)

    # One lane-dense output block per item: decoded in lanes [0, L), pred in
    # the last lane; width rounded up to a multiple of 128 lanes.
    OUTW = ((L + 1 + 127) // 128) * 128

    kernel = _make_fused_kernel(H, K, L, Bpb, OUTW)
    out = pl.pallas_call(
        kernel,
        out_shape=jax.ShapeDtypeStruct((G, Bpb, OUTW), jnp.float32),
        grid_spec=pltpu.PrefetchScalarGridSpec(
            num_scalar_prefetch=0,
            grid=(G,),
            in_specs=[
                pl.BlockSpec((1, Bpb, L), lambda g: (g, 0, 0)),        # x
                pl.BlockSpec((4, H, K * H), lambda g: (0, 0, 0)),      # HxH conv weights
                pl.BlockSpec((7, H, 3 + K), lambda g: (0, 0, 0)),      # packed channel params + cls_b
                pl.BlockSpec((H, Lcf), lambda g: (0, 0)),              # classifier W
            ],
            out_specs=pl.BlockSpec((1, Bpb, OUTW), lambda g: (g, 0, 0)),
        ),
        compiler_params=pltpu.CompilerParams(
            dimension_semantics=("parallel",)),
    )(x.reshape(G, Bpb, L), w_hh, chan_params, cls_w)

    out2d = out.reshape(B, OUTW)
    decoded = out2d[:, :L]
    pred = out2d[:, OUTW - 1:OUTW]
    return decoded, pred


# ----------------------------------------------------------------------------
# Pure-JAX reference (for correctness check)
# ----------------------------------------------------------------------------
def _conv1d_ref(x, w, b):                       # w torch layout [Cout, Cin, K]
    K = w.shape[2]
    Lout = x.shape[2] - K + 1
    out = b[None, :, None]
    for k in range(K):
        out = out + jnp.einsum("oi,bil->bol", w[:, :, k], x[:, :, k:k + Lout])
    return out


def _convT1d_ref(x, w_t, b, K):                 # w_t torch layout [Cin, Cout, K]
    xp = jnp.pad(x, ((0, 0), (0, 0), (K - 1, K - 1)))
    w_eff = jnp.transpose(w_t[:, :, ::-1], (2, 1, 0))
    Lout = x.shape[2] + K - 1
    out = b[None, :, None]
    for k in range(K):
        out = out + jnp.einsum("oi,bil->bol", w_eff[k], xp[:, :, k:k + Lout])
    return out


def _bn_ref(x, layer):
    scale, shift = _bn_scale_shift(layer)
    return x * scale[None, :, None] + shift[None, :, None]


def _maxpool_ref(x, K, p):
    L = x.shape[2]
    xp = jnp.pad(x, ((0, 0), (0, 0), (p, p)), constant_values=-jnp.inf)
    out = xp[:, :, 0:L]
    for k in range(1, K):
        out = jnp.maximum(out, xp[:, :, k:k + L])
    return out


def reference_forward(x, params, *, K):
    p = (K - 1) // 2
    h = x[:, None, :]
    for layer in params["encoder"]:
        h = _maxpool_ref(_bn_ref(jnp.maximum(_conv1d_ref(h, layer["w"], layer["b"]), 0.0),
                                 layer), K, p)
    enc = h
    B, H, Lc = enc.shape
    pred = enc.reshape(B, H * Lc) @ params["cls_w"].T + params["cls_b"]
    h = enc
    for layer in params["decoder"]:
        h = _bn_ref(jnp.maximum(_convT1d_ref(h, layer["w"], layer["b"], K), 0.0), layer)
    return h[:, 0, :], pred


# ----------------------------------------------------------------------------
# Deterministic parameter init (shapes follow the nn.Module __init__)
# ----------------------------------------------------------------------------
def init_params(key, H, K):
    keys = iter(jax.random.split(key, 40))
    nxt = lambda: next(keys)

    def bn(c):
        return dict(
            gamma=1.0 + 0.05 * jax.random.normal(nxt(), (c,), jnp.float32),
            beta=0.05 * jax.random.normal(nxt(), (c,), jnp.float32),
            mean=0.05 * jax.random.normal(nxt(), (c,), jnp.float32),
            var=jax.random.uniform(nxt(), (c,), jnp.float32, 0.5, 1.5),
        )

    enc, cin = [], 1
    for _ in range(3):
        layer = dict(w=0.2 * jax.random.normal(nxt(), (H, cin, K), jnp.float32),
                     b=0.1 * jax.random.normal(nxt(), (H,), jnp.float32))
        layer.update(bn(H))
        enc.append(layer)
        cin = H

    dec, cin = [], H
    for cout in (H, H, 1):
        layer = dict(w=0.2 * jax.random.normal(nxt(), (cin, cout, K), jnp.float32),
                     b=0.1 * jax.random.normal(nxt(), (cout,), jnp.float32))
        layer.update(bn(cout))
        dec.append(layer)
        cin = cout

    cls_w = 0.05 * jax.random.normal(nxt(), (1, H * 163), jnp.float32)
    cls_b = 0.1 * jax.random.normal(nxt(), (1,), jnp.float32)
    return dict(encoder=enc, decoder=dec, cls_w=cls_w, cls_b=cls_b)


if __name__ == "__main__":
    K = 3                      # kernel_size (must be odd)
    H = 8                      # hidden_dim
    B = 2                      # batch
    L = 163 + 3 * (K - 1)      # = 169; required so the hardcoded hidden*163 flatten matches

    key = jax.random.PRNGKey(0)
    k_x, k_p = jax.random.split(key)
    x = jax.random.normal(k_x, (B, L), dtype=jnp.float32)
    params = init_params(k_p, H, K)

    decoded, pred = conv_autoencoder_forward(x, params, K=K)
    decoded = jax.block_until_ready(decoded)
    pred = jax.block_until_ready(pred)

    dec_ref, pred_ref = reference_forward(x, params, K=K)

    assert decoded.shape == (B, L), decoded.shape
    assert pred.shape == (B, 1), pred.shape
    assert jnp.allclose(decoded, dec_ref, rtol=1e-3, atol=1e-3)
    assert jnp.allclose(pred, pred_ref, rtol=1e-3, atol=1e-3)
    print("KERNEL_OK")
</pallas_src>

<mosaic_0001>
module attributes {stable_mosaic.version = 11 : i64} {
  func.func @kernel(%arg0: i32, %arg1: memref<1x2x169xf32, #tpu.memory_space<vmem>>, %arg2: memref<4x8x24xf32, #tpu.memory_space<vmem>>, %arg3: memref<7x8x6xf32, #tpu.memory_space<vmem>>, %arg4: memref<8x163xf32, #tpu.memory_space<vmem>>, %arg5: memref<1x2x256xf32, #tpu.memory_space<vmem>>) attributes {dimension_semantics = [#tpu.dimension_semantics<parallel>], iteration_bounds = array<i64: 1>, scalar_prefetch = 0 : i64, scratch_operands = 0 : i64, tpu.core_type = #tpu.core_type<tc>, window_params = [{transform_indices = @transform_0, window_bounds = array<i64: 1, 2, 169>}, {pipeline_mode = #tpu.pipeline_mode<synchronous>, transform_indices = @transform_1, window_bounds = array<i64: 4, 8, 24>}, {pipeline_mode = #tpu.pipeline_mode<synchronous>, transform_indices = @transform_2, window_bounds = array<i64: 7, 8, 6>}, {pipeline_mode = #tpu.pipeline_mode<synchronous>, transform_indices = @transform_3, window_bounds = array<i64: 8, 163>}, {transform_indices = @transform_4, window_bounds = array<i64: 1, 2, 256>}]} {
    %c0 = arith.constant 0 : index
    %c0_0 = arith.constant 0 : index
    %c0_1 = arith.constant 0 : index
    %0 = vector.load %arg1[%c0, %c0_0, %c0_1] : memref<1x2x169xf32, #tpu.memory_space<vmem>>, vector<1x2x169xf32>
    %1 = vector.shape_cast %0 : vector<1x2x169xf32> to vector<2x169xf32>
    %c0_2 = arith.constant 0 : index
    %c0_3 = arith.constant 0 : index
    %2 = vector.load %arg4[%c0_2, %c0_3] : memref<8x163xf32, #tpu.memory_space<vmem>>, vector<8x163xf32>
    %c0_4 = arith.constant 0 : index
    %c0_5 = arith.constant 0 : index
    %c0_6 = arith.constant 0 : index
    %3 = vector.load %arg3[%c0_4, %c0_5, %c0_6] : memref<7x8x6xf32, #tpu.memory_space<vmem>>, vector<1x8x6xf32>
    %4 = vector.shape_cast %3 : vector<1x8x6xf32> to vector<8x6xf32>
    %c1 = arith.constant 1 : index
    %c0_7 = arith.constant 0 : index
    %c0_8 = arith.constant 0 : index
    %5 = vector.load %arg3[%c1, %c0_7, %c0_8] : memref<7x8x6xf32, #tpu.memory_space<vmem>>, vector<1x8x6xf32>
    %6 = vector.shape_cast %5 : vector<1x8x6xf32> to vector<8x6xf32>
    %c2 = arith.constant 2 : index
    %c0_9 = arith.constant 0 : index
    %c0_10 = arith.constant 0 : index
    %7 = vector.load %arg3[%c2, %c0_9, %c0_10] : memref<7x8x6xf32, #tpu.memory_space<vmem>>, vector<1x8x6xf32>
    %8 = vector.shape_cast %7 : vector<1x8x6xf32> to vector<8x6xf32>
    %c3 = arith.constant 3 : index
    %c0_11 = arith.constant 0 : index
    %c0_12 = arith.constant 0 : index
    %9 = vector.load %arg3[%c3, %c0_11, %c0_12] : memref<7x8x6xf32, #tpu.memory_space<vmem>>, vector<1x8x6xf32>
    %10 = vector.shape_cast %9 : vector<1x8x6xf32> to vector<8x6xf32>
    %c4 = arith.constant 4 : index
    %c0_13 = arith.constant 0 : index
    %c0_14 = arith.constant 0 : index
    %11 = vector.load %arg3[%c4, %c0_13, %c0_14] : memref<7x8x6xf32, #tpu.memory_space<vmem>>, vector<1x8x6xf32>
    %12 = vector.shape_cast %11 : vector<1x8x6xf32> to vector<8x6xf32>
    %c5 = arith.constant 5 : index
    %c0_15 = arith.constant 0 : index
    %c0_16 = arith.constant 0 : index
    %13 = vector.load %arg3[%c5, %c0_15, %c0_16] : memref<7x8x6xf32, #tpu.memory_space<vmem>>, vector<1x8x6xf32>
    %14 = vector.shape_cast %13 : vector<1x8x6xf32> to vector<8x6xf32>
    %c6 = arith.constant 6 : index
    %c0_17 = arith.constant 0 : index
    %c0_18 = arith.constant 0 : index
    %15 = vector.load %arg3[%c6, %c0_17, %c0_18] : memref<7x8x6xf32, #tpu.memory_space<vmem>>, vector<1x8x6xf32>
    %16 = vector.shape_cast %15 : vector<1x8x6xf32> to vector<8x6xf32>
    %c0_19 = arith.constant 0 : index
    %c0_20 = arith.constant 0 : index
    %c0_21 = arith.constant 0 : index
    %17 = vector.load %arg2[%c0_19, %c0_20, %c0_21] : memref<4x8x24xf32, #tpu.memory_space<vmem>>, vector<1x8x24xf32>
    %18 = vector.shape_cast %17 : vector<1x8x24xf32> to vector<8x24xf32>
    %c1_22 = arith.constant 1 : index
    %c0_23 = arith.constant 0 : index
    %c0_24 = arith.constant 0 : index
    %19 = vector.load %arg2[%c1_22, %c0_23, %c0_24] : memref<4x8x24xf32, #tpu.memory_space<vmem>>, vector<1x8x24xf32>
    %20 = vector.shape_cast %19 : vector<1x8x24xf32> to vector<8x24xf32>
    %c2_25 = arith.constant 2 : index
    %c0_26 = arith.constant 0 : index
    %c0_27 = arith.constant 0 : index
    %21 = vector.load %arg2[%c2_25, %c0_26, %c0_27] : memref<4x8x24xf32, #tpu.memory_space<vmem>>, vector<1x8x24xf32>
    %22 = vector.shape_cast %21 : vector<1x8x24xf32> to vector<8x24xf32>
    %c3_28 = arith.constant 3 : index
    %c0_29 = arith.constant 0 : index
    %c0_30 = arith.constant 0 : index
    %23 = vector.load %arg2[%c3_28, %c0_29, %c0_30] : memref<4x8x24xf32, #tpu.memory_space<vmem>>, vector<1x8x24xf32>
    %24 = vector.shape_cast %23 : vector<1x8x24xf32> to vector<8x24xf32>
    %25 = vector.extract_strided_slice %16 {offsets = [0, 0], sizes = [1, 1], strides = [1, 1]} : vector<8x6xf32> to vector<1x1xf32>
    %26 = vector.extract_strided_slice %1 {offsets = [0, 0], sizes = [1, 169], strides = [1, 1]} : vector<2x169xf32> to vector<1x169xf32>
    %27 = vector.extract_strided_slice %4 {offsets = [0, 3], sizes = [8, 3], strides = [1, 1]} : vector<8x6xf32> to vector<8x3xf32>
    %28 = vector.extract_strided_slice %27 {offsets = [0, 0], sizes = [8, 1], strides = [1, 1]} : vector<8x3xf32> to vector<8x1xf32>
    %29 = vector.extract_strided_slice %26 {offsets = [0, 0], sizes = [1, 167], strides = [1, 1]} : vector<1x169xf32> to vector<1x167xf32>
    %30 = vector.broadcast %28 : vector<8x1xf32> to vector<8x167xf32>
    %31 = vector.broadcast %29 : vector<1x167xf32> to vector<8x167xf32>
    %32 = arith.mulf %30, %31 : vector<8x167xf32>
    %33 = vector.extract_strided_slice %27 {offsets = [0, 1], sizes = [8, 1], strides = [1, 1]} : vector<8x3xf32> to vector<8x1xf32>
    %34 = vector.extract_strided_slice %26 {offsets = [0, 1], sizes = [1, 167], strides = [1, 1]} : vector<1x169xf32> to vector<1x167xf32>
    %35 = vector.broadcast %33 : vector<8x1xf32> to vector<8x167xf32>
    %36 = vector.broadcast %34 : vector<1x167xf32> to vector<8x167xf32>
    %37 = arith.mulf %35, %36 : vector<8x167xf32>
    %38 = arith.addf %32, %37 : vector<8x167xf32>
    %39 = vector.extract_strided_slice %27 {offsets = [0, 2], sizes = [8, 1], strides = [1, 1]} : vector<8x3xf32> to vector<8x1xf32>
    %40 = vector.extract_strided_slice %26 {offsets = [0, 2], sizes = [1, 167], strides = [1, 1]} : vector<1x169xf32> to vector<1x167xf32>
    %41 = vector.broadcast %39 : vector<8x1xf32> to vector<8x167xf32>
    %42 = vector.broadcast %40 : vector<1x167xf32> to vector<8x167xf32>
    %43 = arith.mulf %41, %42 : vector<8x167xf32>
    %44 = arith.addf %38, %43 : vector<8x167xf32>
    %45 = vector.extract_strided_slice %4 {offsets = [0, 0], sizes = [8, 1], strides = [1, 1]} : vector<8x6xf32> to vector<8x1xf32>
    %46 = vector.broadcast %45 : vector<8x1xf32> to vector<8x167xf32>
    %47 = arith.addf %44, %46 : vector<8x167xf32>
    %cst = arith.constant 0.000000e+00 : f32
    %48 = vector.broadcast %cst : f32 to vector<8x167xf32>
    %49 = arith.maximumf %47, %48 : vector<8x167xf32>
    %50 = vector.extract_strided_slice %4 {offsets = [0, 1], sizes = [8, 1], strides = [1, 1]} : vector<8x6xf32> to vector<8x1xf32>
    %51 = vector.broadcast %50 : vector<8x1xf32> to vector<8x167xf32>
    %52 = arith.mulf %49, %51 : vector<8x167xf32>
    %53 = vector.extract_strided_slice %4 {offsets = [0, 2], sizes = [8, 1], strides = [1, 1]} : vector<8x6xf32> to vector<8x1xf32>
    %54 = vector.broadcast %53 : vector<8x1xf32> to vector<8x167xf32>
    %55 = arith.addf %52, %54 : vector<8x167xf32>
    %cst_31 = arith.constant 0xFF800000 : f32
    %56 = vector.broadcast %cst_31 : f32 to vector<8x1xf32>
    %57 = tpu.concatenate %56, %55, %56 in 1 : vector<8x1xf32>, vector<8x167xf32>, vector<8x1xf32> -> vector<8x169xf32>
    %58 = vector.extract_strided_slice %57 {offsets = [0, 0], sizes = [8, 167], strides = [1, 1]} : vector<8x169xf32> to vector<8x167xf32>
    %59 = arith.maximumf %55, %58 : vector<8x167xf32>
    %60 = vector.extract_strided_slice %57 {offsets = [0, 2], sizes = [8, 167], strides = [1, 1]} : vector<8x169xf32> to vector<8x167xf32>
    %61 = arith.maximumf %59, %60 : vector<8x167xf32>
    %62 = vector.extract_strided_slice %61 {offsets = [0, 0], sizes = [8, 165], strides = [1, 1]} : vector<8x167xf32> to vector<8x165xf32>
    %63 = vector.extract_strided_slice %61 {offsets = [0, 1], sizes = [8, 165], strides = [1, 1]} : vector<8x167xf32> to vector<8x165xf32>
    %64 = vector.extract_strided_slice %61 {offsets = [0, 2], sizes = [8, 165], strides = [1, 1]} : vector<8x167xf32> to vector<8x165xf32>
    %65 = tpu.concatenate %62, %63, %64 in 0 : vector<8x165xf32>, vector<8x165xf32>, vector<8x165xf32> -> vector<24x165xf32>
    %cst_32 = arith.constant dense<0.000000e+00> : vector<8x165xf32>
    %66 = tpu.matmul %18, %65, %cst_32 {dimension_numbers = #tpu.dot_dimension_numbers<[1], [0], [0], [1], [0, 0, 1, 1], [], []>} : vector<8x24xf32>, vector<24x165xf32>, vector<8x165xf32> -> vector<8x165xf32>
    %67 = vector.extract_strided_slice %6 {offsets = [0, 0], sizes = [8, 1], strides = [1, 1]} : vector<8x6xf32> to vector<8x1xf32>
    %68 = vector.broadcast %67 : vector<8x1xf32> to vector<8x165xf32>
    %69 = arith.addf %66, %68 : vector<8x165xf32>
    %cst_33 = arith.constant 0.000000e+00 : f32
    %70 = vector.broadcast %cst_33 : f32 to vector<8x165xf32>
    %71 = arith.maximumf %69, %70 : vector<8x165xf32>
    %72 = vector.extract_strided_slice %6 {offsets = [0, 1], sizes = [8, 1], strides = [1, 1]} : vector<8x6xf32> to vector<8x1xf32>
    %73 = vector.broadcast %72 : vector<8x1xf32> to vector<8x165xf32>
    %74 = arith.mulf %71, %73 : vector<8x165xf32>
    %75 = vector.extract_strided_slice %6 {offsets = [0, 2], sizes = [8, 1], strides = [1, 1]} : vector<8x6xf32> to vector<8x1xf32>
    %76 = vector.broadcast %75 : vector<8x1xf32> to vector<8x165xf32>
    %77 = arith.addf %74, %76 : vector<8x165xf32>
    %cst_34 = arith.constant 0xFF800000 : f32
    %78 = vector.broadcast %cst_34 : f32 to vector<8x1xf32>
    %79 = tpu.concatenate %78, %77, %78 in 1 : vector<8x1xf32>, vector<8x165xf32>, vector<8x1xf32> -> vector<8x167xf32>
    %80 = vector.extract_strided_slice %79 {offsets = [0, 0], sizes = [8, 165], strides = [1, 1]} : vector<8x167xf32> to vector<8x165xf32>
    %81 = arith.maximumf %77, %80 : vector<8x165xf32>
    %82 = vector.extract_strided_slice %79 {offsets = [0, 2], sizes = [8, 165], strides = [1, 1]} : vector<8x167xf32> to vector<8x165xf32>
    %83 = arith.maximumf %81, %82 : vector<8x165xf32>
    %84 = vector.extract_strided_slice %83 {offsets = [0, 0], sizes = [8, 163], strides = [1, 1]} : vector<8x165xf32> to vector<8x163xf32>
    %85 = vector.extract_strided_slice %83 {offsets = [0, 1], sizes = [8, 163], strides = [1, 1]} : vector<8x165xf32> to vector<8x163xf32>
    %86 = vector.extract_strided_slice %83 {offsets = [0, 2], sizes = [8, 163], strides = [1, 1]} : vector<8x165xf32> to vector<8x163xf32>
    %87 = tpu.concatenate %84, %85, %86 in 0 : vector<8x163xf32>, vector<8x163xf32>, vector<8x163xf32> -> vector<24x163xf32>
    %cst_35 = arith.constant dense<0.000000e+00> : vector<8x163xf32>
    %88 = tpu.matmul %20, %87, %cst_35 {dimension_numbers = #tpu.dot_dimension_numbers<[1], [0], [0], [1], [0, 0, 1, 1], [], []>} : vector<8x24xf32>, vector<24x163xf32>, vector<8x163xf32> -> vector<8x163xf32>
    %89 = vector.extract_strided_slice %8 {offsets = [0, 0], sizes = [8, 1], strides = [1, 1]} : vector<8x6xf32> to vector<8x1xf32>
    %90 = vector.broadcast %89 : vector<8x1xf32> to vector<8x163xf32>
    %91 = arith.addf %88, %90 : vector<8x163xf32>
    %cst_36 = arith.constant 0.000000e+00 : f32
    %92 = vector.broadcast %cst_36 : f32 to vector<8x163xf32>
    %93 = arith.maximumf %91, %92 : vector<8x163xf32>
    %94 = vector.extract_strided_slice %8 {offsets = [0, 1], sizes = [8, 1], strides = [1, 1]} : vector<8x6xf32> to vector<8x1xf32>
    %95 = vector.broadcast %94 : vector<8x1xf32> to vector<8x163xf32>
    %96 = arith.mulf %93, %95 : vector<8x163xf32>
    %97 = vector.extract_strided_slice %8 {offsets = [0, 2], sizes = [8, 1], strides = [1, 1]} : vector<8x6xf32> to vector<8x1xf32>
    %98 = vector.broadcast %97 : vector<8x1xf32> to vector<8x163xf32>
    %99 = arith.addf %96, %98 : vector<8x163xf32>
    %cst_37 = arith.constant 0xFF800000 : f32
    %100 = vector.broadcast %cst_37 : f32 to vector<8x1xf32>
    %101 = tpu.concatenate %100, %99, %100 in 1 : vector<8x1xf32>, vector<8x163xf32>, vector<8x1xf32> -> vector<8x165xf32>
    %102 = vector.extract_strided_slice %101 {offsets = [0, 0], sizes = [8, 163], strides = [1, 1]} : vector<8x165xf32> to vector<8x163xf32>
    %103 = arith.maximumf %99, %102 : vector<8x163xf32>
    %104 = vector.extract_strided_slice %101 {offsets = [0, 2], sizes = [8, 163], strides = [1, 1]} : vector<8x165xf32> to vector<8x163xf32>
    %105 = arith.maximumf %103, %104 : vector<8x163xf32>
    %106 = arith.mulf %105, %2 : vector<8x163xf32>
    %cst_38 = arith.constant dense<0.000000e+00> : vector<8xf32>
    %107 = vector.multi_reduction <add>, %106, %cst_38 [1] : vector<8x163xf32> to vector<8xf32>
    %108 = vector.shape_cast %107 : vector<8xf32> to vector<8x1xf32>
    %cst_39 = arith.constant dense<0.000000e+00> : vector<1xf32>
    %109 = vector.multi_reduction <add>, %108, %cst_39 [0] : vector<8x1xf32> to vector<1xf32>
    %110 = vector.shape_cast %109 : vector<1xf32> to vector<1x1xf32>
    %111 = arith.addf %110, %25 : vector<1x1xf32>
    %cst_40 = arith.constant 0.000000e+00 : f32
    %112 = vector.broadcast %cst_40 : f32 to vector<8x2xf32>
    %113 = tpu.concatenate %112, %105, %112 in 1 : vector<8x2xf32>, vector<8x163xf32>, vector<8x2xf32> -> vector<8x167xf32>
    %114 = vector.extract_strided_slice %113 {offsets = [0, 0], sizes = [8, 165], strides = [1, 1]} : vector<8x167xf32> to vector<8x165xf32>
    %115 = vector.extract_strided_slice %113 {offsets = [0, 1], sizes = [8, 165], strides = [1, 1]} : vector<8x167xf32> to vector<8x165xf32>
    %116 = vector.extract_strided_slice %113 {offsets = [0, 2], sizes = [8, 165], strides = [1, 1]} : vector<8x167xf32> to vector<8x165xf32>
    %117 = tpu.concatenate %114, %115, %116 in 0 : vector<8x165xf32>, vector<8x165xf32>, vector<8x165xf32> -> vector<24x165xf32>
    %cst_41 = arith.constant dense<0.000000e+00> : vector<8x165xf32>
    %118 = tpu.matmul %22, %117, %cst_41 {dimension_numbers = #tpu.dot_dimension_numbers<[1], [0], [0], [1], [0, 0, 1, 1], [], []>} : vector<8x24xf32>, vector<24x165xf32>, vector<8x165xf32> -> vector<8x165xf32>
    %119 = vector.extract_strided_slice %10 {offsets = [0, 0], sizes = [8, 1], strides = [1, 1]} : vector<8x6xf32> to vector<8x1xf32>
    %120 = vector.broadcast %119 : vector<8x1xf32> to vector<8x165xf32>
    %121 = arith.addf %118, %120 : vector<8x165xf32>
    %cst_42 = arith.constant 0.000000e+00 : f32
    %122 = vector.broadcast %cst_42 : f32 to vector<8x165xf32>
    %123 = arith.maximumf %121, %122 : vector<8x165xf32>
    %124 = vector.extract_strided_slice %10 {offsets = [0, 1], sizes = [8, 1], strides = [1, 1]} : vector<8x6xf32> to vector<8x1xf32>
    %125 = vector.broadcast %124 : vector<8x1xf32> to vector<8x165xf32>
    %126 = arith.mulf %123, %125 : vector<8x165xf32>
    %127 = vector.extract_strided_slice %10 {offsets = [0, 2], sizes = [8, 1], strides = [1, 1]} : vector<8x6xf32> to vector<8x1xf32>
    %128 = vector.broadcast %127 : vector<8x1xf32> to vector<8x165xf32>
    %129 = arith.addf %126, %128 : vector<8x165xf32>
    %cst_43 = arith.constant 0.000000e+00 : f32
    %130 = vector.broadcast %cst_43 : f32 to vector<8x2xf32>
    %131 = tpu.concatenate %130, %129, %130 in 1 : vector<8x2xf32>, vector<8x165xf32>, vector<8x2xf32> -> vector<8x169xf32>
    %132 = vector.extract_strided_slice %131 {offsets = [0, 0], sizes = [8, 167], strides = [1, 1]} : vector<8x169xf32> to vector<8x167xf32>
    %133 = vector.extract_strided_slice %131 {offsets = [0, 1], sizes = [8, 167], strides = [1, 1]} : vector<8x169xf32> to vector<8x167xf32>
    %134 = vector.extract_strided_slice %131 {offsets = [0, 2], sizes = [8, 167], strides = [1, 1]} : vector<8x169xf32> to vector<8x167xf32>
    %135 = tpu.concatenate %132, %133, %134 in 0 : vector<8x167xf32>, vector<8x167xf32>, vector<8x167xf32> -> vector<24x167xf32>
    %cst_44 = arith.constant dense<0.000000e+00> : vector<8x167xf32>
    %136 = tpu.matmul %24, %135, %cst_44 {dimension_numbers = #tpu.dot_dimension_numbers<[1], [0], [0], [1], [0, 0, 1, 1], [], []>} : vector<8x24xf32>, vector<24x167xf32>, vector<8x167xf32> -> vector<8x167xf32>
    %137 = vector.extract_strided_slice %12 {offsets = [0, 0], sizes = [8, 1], strides = [1, 1]} : vector<8x6xf32> to vector<8x1xf32>
    %138 = vector.broadcast %137 : vector<8x1xf32> to vector<8x167xf32>
    %139 = arith.addf %136, %138 : vector<8x167xf32>
    %cst_45 = arith.constant 0.000000e+00 : f32
    %140 = vector.broadcast %cst_45 : f32 to vector<8x167xf32>
    %141 = arith.maximumf %139, %140 : vector<8x167xf32>
    %142 = vector.extract_strided_slice %12 {offsets = [0, 1], sizes = [8, 1], strides = [1, 1]} : vector<8x6xf32> to vector<8x1xf32>
    %143 = vector.broadcast %142 : vector<8x1xf32> to vector<8x167xf32>
    %144 = arith.mulf %141, %143 : vector<8x167xf32>
    %145 = vector.extract_strided_slice %12 {offsets = [0, 2], sizes = [8, 1], strides = [1, 1]} : vector<8x6xf32> to vector<8x1xf32>
    %146 = vector.broadcast %145 : vector<8x1xf32> to vector<8x167xf32>
    %147 = arith.addf %144, %146 : vector<8x167xf32>
    %148 = vector.extract_strided_slice %14 {offsets = [0, 3], sizes = [8, 3], strides = [1, 1]} : vector<8x6xf32> to vector<8x3xf32>
    %cst_46 = arith.constant 0.000000e+00 : f32
    %149 = vector.broadcast %cst_46 : f32 to vector<8x2xf32>
    %150 = tpu.concatenate %149, %147, %149 in 1 : vector<8x2xf32>, vector<8x167xf32>, vector<8x2xf32> -> vector<8x171xf32>
    %151 = vector.extract_strided_slice %148 {offsets = [0, 0], sizes = [8, 1], strides = [1, 1]} : vector<8x3xf32> to vector<8x1xf32>
    %152 = vector.extract_strided_slice %150 {offsets = [0, 0], sizes = [8, 169], strides = [1, 1]} : vector<8x171xf32> to vector<8x169xf32>
    %153 = vector.broadcast %151 : vector<8x1xf32> to vector<8x169xf32>
    %154 = arith.mulf %153, %152 : vector<8x169xf32>
    %155 = vector.extract_strided_slice %148 {offsets = [0, 1], sizes = [8, 1], strides = [1, 1]} : vector<8x3xf32> to vector<8x1xf32>
    %156 = vector.extract_strided_slice %150 {offsets = [0, 1], sizes = [8, 169], strides = [1, 1]} : vector<8x171xf32> to vector<8x169xf32>
    %157 = vector.broadcast %155 : vector<8x1xf32> to vector<8x169xf32>
    %158 = arith.mulf %157, %156 : vector<8x169xf32>
    %159 = arith.addf %154, %158 : vector<8x169xf32>
    %160 = vector.extract_strided_slice %148 {offsets = [0, 2], sizes = [8, 1], strides = [1, 1]} : vector<8x3xf32> to vector<8x1xf32>
    %161 = vector.extract_strided_slice %150 {offsets = [0, 2], sizes = [8, 169], strides = [1, 1]} : vector<8x171xf32> to vector<8x169xf32>
    %162 = vector.broadcast %160 : vector<8x1xf32> to vector<8x169xf32>
    %163 = arith.mulf %162, %161 : vector<8x169xf32>
    %164 = arith.addf %159, %163 : vector<8x169xf32>
    %cst_47 = arith.constant dense<0.000000e+00> : vector<169xf32>
    %165 = vector.multi_reduction <add>, %164, %cst_47 [0] : vector<8x169xf32> to vector<169xf32>
    %166 = vector.shape_cast %165 : vector<169xf32> to vector<1x169xf32>
    %167 = vector.extract_strided_slice %14 {offsets = [0, 0], sizes = [1, 1], strides = [1, 1]} : vector<8x6xf32> to vector<1x1xf32>
    %168 = vector.broadcast %167 : vector<1x1xf32> to vector<1x169xf32>
    %169 = arith.addf %166, %168 : vector<1x169xf32>
    %cst_48 = arith.constant 0.000000e+00 : f32
    %170 = vector.broadcast %cst_48 : f32 to vector<1x169xf32>
    %171 = arith.maximumf %169, %170 : vector<1x169xf32>
    %172 = vector.extract_strided_slice %14 {offsets = [0, 1], sizes = [1, 1], strides = [1, 1]} : vector<8x6xf32> to vector<1x1xf32>
    %173 = vector.broadcast %172 : vector<1x1xf32> to vector<1x169xf32>
    %174 = arith.mulf %171, %173 : vector<1x169xf32>
    %175 = vector.extract_strided_slice %14 {offsets = [0, 2], sizes = [1, 1], strides = [1, 1]} : vector<8x6xf32> to vector<1x1xf32>
    %176 = vector.broadcast %175 : vector<1x1xf32> to vector<1x169xf32>
    %177 = arith.addf %174, %176 : vector<1x169xf32>
    %cst_49 = arith.constant 0.000000e+00 : f32
    %178 = vector.broadcast %cst_49 : f32 to vector<1x86xf32>
    %179 = tpu.concatenate %177, %178, %111 in 1 : vector<1x169xf32>, vector<1x86xf32>, vector<1x1xf32> -> vector<1x256xf32>
    %180 = vector.extract_strided_slice %1 {offsets = [1, 0], sizes = [1, 169], strides = [1, 1]} : vector<2x169xf32> to vector<1x169xf32>
    %181 = vector.extract_strided_slice %4 {offsets = [0, 3], sizes = [8, 3], strides = [1, 1]} : vector<8x6xf32> to vector<8x3xf32>
    %182 = vector.extract_strided_slice %181 {offsets = [0, 0], sizes = [8, 1], strides = [1, 1]} : vector<8x3xf32> to vector<8x1xf32>
    %183 = vector.extract_strided_slice %180 {offsets = [0, 0], sizes = [1, 167], strides = [1, 1]} : vector<1x169xf32> to vector<1x167xf32>
    %184 = vector.broadcast %182 : vector<8x1xf32> to vector<8x167xf32>
    %185 = vector.broadcast %183 : vector<1x167xf32> to vector<8x167xf32>
    %186 = arith.mulf %184, %185 : vector<8x167xf32>
    %187 = vector.extract_strided_slice %181 {offsets = [0, 1], sizes = [8, 1], strides = [1, 1]} : vector<8x3xf32> to vector<8x1xf32>
    %188 = vector.extract_strided_slice %180 {offsets = [0, 1], sizes = [1, 167], strides = [1, 1]} : vector<1x169xf32> to vector<1x167xf32>
    %189 = vector.broadcast %187 : vector<8x1xf32> to vector<8x167xf32>
    %190 = vector.broadcast %188 : vector<1x167xf32> to vector<8x167xf32>
    %191 = arith.mulf %189, %190 : vector<8x167xf32>
    %192 = arith.addf %186, %191 : vector<8x167xf32>
    %193 = vector.extract_strided_slice %181 {offsets = [0, 2], sizes = [8, 1], strides = [1, 1]} : vector<8x3xf32> to vector<8x1xf32>
    %194 = vector.extract_strided_slice %180 {offsets = [0, 2], sizes = [1, 167], strides = [1, 1]} : vector<1x169xf32> to vector<1x167xf32>
    %195 = vector.broadcast %193 : vector<8x1xf32> to vector<8x167xf32>
    %196 = vector.broadcast %194 : vector<1x167xf32> to vector<8x167xf32>
    %197 = arith.mulf %195, %196 : vector<8x167xf32>
    %198 = arith.addf %192, %197 : vector<8x167xf32>
    %199 = vector.extract_strided_slice %4 {offsets = [0, 0], sizes = [8, 1], strides = [1, 1]} : vector<8x6xf32> to vector<8x1xf32>
    %200 = vector.broadcast %199 : vector<8x1xf32> to vector<8x167xf32>
    %201 = arith.addf %198, %200 : vector<8x167xf32>
    %cst_50 = arith.constant 0.000000e+00 : f32
    %202 = vector.broadcast %cst_50 : f32 to vector<8x167xf32>
    %203 = arith.maximumf %201, %202 : vector<8x167xf32>
    %204 = vector.extract_strided_slice %4 {offsets = [0, 1], sizes = [8, 1], strides = [1, 1]} : vector<8x6xf32> to vector<8x1xf32>
    %205 = vector.broadcast %204 : vector<8x1xf32> to vector<8x167xf32>
    %206 = arith.mulf %203, %205 : vector<8x167xf32>
    %207 = vector.extract_strided_slice %4 {offsets = [0, 2], sizes = [8, 1], strides = [1, 1]} : vector<8x6xf32> to vector<8x1xf32>
    %208 = vector.broadcast %207 : vector<8x1xf32> to vector<8x167xf32>
    %209 = arith.addf %206, %208 : vector<8x167xf32>
    %cst_51 = arith.constant 0xFF800000 : f32
    %210 = vector.broadcast %cst_51 : f32 to vector<8x1xf32>
    %211 = tpu.concatenate %210, %209, %210 in 1 : vector<8x1xf32>, vector<8x167xf32>, vector<8x1xf32> -> vector<8x169xf32>
    %212 = vector.extract_strided_slice %211 {offsets = [0, 0], sizes = [8, 167], strides = [1, 1]} : vector<8x169xf32> to vector<8x167xf32>
    %213 = arith.maximumf %209, %212 : vector<8x167xf32>
    %214 = vector.extract_strided_slice %211 {offsets = [0, 2], sizes = [8, 167], strides = [1, 1]} : vector<8x169xf32> to vector<8x167xf32>
    %215 = arith.maximumf %213, %214 : vector<8x167xf32>
    %216 = vector.extract_strided_slice %215 {offsets = [0, 0], sizes = [8, 165], strides = [1, 1]} : vector<8x167xf32> to vector<8x165xf32>
    %217 = vector.extract_strided_slice %215 {offsets = [0, 1], sizes = [8, 165], strides = [1, 1]} : vector<8x167xf32> to vector<8x165xf32>
    %218 = vector.extract_strided_slice %215 {offsets = [0, 2], sizes = [8, 165], strides = [1, 1]} : vector<8x167xf32> to vector<8x165xf32>
    %219 = tpu.concatenate %216, %217, %218 in 0 : vector<8x165xf32>, vector<8x165xf32>, vector<8x165xf32> -> vector<24x165xf32>
    %cst_52 = arith.constant dense<0.000000e+00> : vector<8x165xf32>
    %220 = tpu.matmul %18, %219, %cst_52 {dimension_numbers = #tpu.dot_dimension_numbers<[1], [0], [0], [1], [0, 0, 1, 1], [], []>} : vector<8x24xf32>, vector<24x165xf32>, vector<8x165xf32> -> vector<8x165xf32>
    %221 = vector.extract_strided_slice %6 {offsets = [0, 0], sizes = [8, 1], strides = [1, 1]} : vector<8x6xf32> to vector<8x1xf32>
    %222 = vector.broadcast %221 : vector<8x1xf32> to vector<8x165xf32>
    %223 = arith.addf %220, %222 : vector<8x165xf32>
    %cst_53 = arith.constant 0.000000e+00 : f32
    %224 = vector.broadcast %cst_53 : f32 to vector<8x165xf32>
    %225 = arith.maximumf %223, %224 : vector<8x165xf32>
    %226 = vector.extract_strided_slice %6 {offsets = [0, 1], sizes = [8, 1], strides = [1, 1]} : vector<8x6xf32> to vector<8x1xf32>
    %227 = vector.broadcast %226 : vector<8x1xf32> to vector<8x165xf32>
    %228 = arith.mulf %225, %227 : vector<8x165xf32>
    %229 = vector.extract_strided_slice %6 {offsets = [0, 2], sizes = [8, 1], strides = [1, 1]} : vector<8x6xf32> to vector<8x1xf32>
    %230 = vector.broadcast %229 : vector<8x1xf32> to vector<8x165xf32>
    %231 = arith.addf %228, %230 : vector<8x165xf32>
    %cst_54 = arith.constant 0xFF800000 : f32
    %232 = vector.broadcast %cst_54 : f32 to vector<8x1xf32>
    %233 = tpu.concatenate %232, %231, %232 in 1 : vector<8x1xf32>, vector<8x165xf32>, vector<8x1xf32> -> vector<8x167xf32>
    %234 = vector.extract_strided_slice %233 {offsets = [0, 0], sizes = [8, 165], strides = [1, 1]} : vector<8x167xf32> to vector<8x165xf32>
    %235 = arith.maximumf %231, %234 : vector<8x165xf32>
    %236 = vector.extract_strided_slice %233 {offsets = [0, 2], sizes = [8, 165], strides = [1, 1]} : vector<8x167xf32> to vector<8x165xf32>
    %237 = arith.maximumf %235, %236 : vector<8x165xf32>
    %238 = vector.extract_strided_slice %237 {offsets = [0, 0], sizes = [8, 163], strides = [1, 1]} : vector<8x165xf32> to vector<8x163xf32>
    %239 = vector.extract_strided_slice %237 {offsets = [0, 1], sizes = [8, 163], strides = [1, 1]} : vector<8x165xf32> to vector<8x163xf32>
    %240 = vector.extract_strided_slice %237 {offsets = [0, 2], sizes = [8, 163], strides = [1, 1]} : vector<8x165xf32> to vector<8x163xf32>
    %241 = tpu.concatenate %238, %239, %240 in 0 : vector<8x163xf32>, vector<8x163xf32>, vector<8x163xf32> -> vector<24x163xf32>
    %cst_55 = arith.constant dense<0.000000e+00> : vector<8x163xf32>
    %242 = tpu.matmul %20, %241, %cst_55 {dimension_numbers = #tpu.dot_dimension_numbers<[1], [0], [0], [1], [0, 0, 1, 1], [], []>} : vector<8x24xf32>, vector<24x163xf32>, vector<8x163xf32> -> vector<8x163xf32>
    %243 = vector.extract_strided_slice %8 {offsets = [0, 0], sizes = [8, 1], strides = [1, 1]} : vector<8x6xf32> to vector<8x1xf32>
    %244 = vector.broadcast %243 : vector<8x1xf32> to vector<8x163xf32>
    %245 = arith.addf %242, %244 : vector<8x163xf32>
    %cst_56 = arith.constant 0.000000e+00 : f32
    %246 = vector.broadcast %cst_56 : f32 to vector<8x163xf32>
    %247 = arith.maximumf %245, %246 : vector<8x163xf32>
    %248 = vector.extract_strided_slice %8 {offsets = [0, 1], sizes = [8, 1], strides = [1, 1]} : vector<8x6xf32> to vector<8x1xf32>
    %249 = vector.broadcast %248 : vector<8x1xf32> to vector<8x163xf32>
    %250 = arith.mulf %247, %249 : vector<8x163xf32>
    %251 = vector.extract_strided_slice %8 {offsets = [0, 2], sizes = [8, 1], strides = [1, 1]} : vector<8x6xf32> to vector<8x1xf32>
    %252 = vector.broadcast %251 : vector<8x1xf32> to vector<8x163xf32>
    %253 = arith.addf %250, %252 : vector<8x163xf32>
    %cst_57 = arith.constant 0xFF800000 : f32
    %254 = vector.broadcast %cst_57 : f32 to vector<8x1xf32>
    %255 = tpu.concatenate %254, %253, %254 in 1 : vector<8x1xf32>, vector<8x163xf32>, vector<8x1xf32> -> vector<8x165xf32>
    %256 = vector.extract_strided_slice %255 {offsets = [0, 0], sizes = [8, 163], strides = [1, 1]} : vector<8x165xf32> to vector<8x163xf32>
    %257 = arith.maximumf %253, %256 : vector<8x163xf32>
    %258 = vector.extract_strided_slice %255 {offsets = [0, 2], sizes = [8, 163], strides = [1, 1]} : vector<8x165xf32> to vector<8x163xf32>
    %259 = arith.maximumf %257, %258 : vector<8x163xf32>
    %260 = arith.mulf %259, %2 : vector<8x163xf32>
    %cst_58 = arith.constant dense<0.000000e+00> : vector<8xf32>
    %261 = vector.multi_reduction <add>, %260, %cst_58 [1] : vector<8x163xf32> to vector<8xf32>
    %262 = vector.shape_cast %261 : vector<8xf32> to vector<8x1xf32>
    %cst_59 = arith.constant dense<0.000000e+00> : vector<1xf32>
    %263 = vector.multi_reduction <add>, %262, %cst_59 [0] : vector<8x1xf32> to vector<1xf32>
    %264 = vector.shape_cast %263 : vector<1xf32> to vector<1x1xf32>
    %265 = arith.addf %264, %25 : vector<1x1xf32>
    %cst_60 = arith.constant 0.000000e+00 : f32
    %266 = vector.broadcast %cst_60 : f32 to vector<8x2xf32>
    %267 = tpu.concatenate %266, %259, %266 in 1 : vector<8x2xf32>, vector<8x163xf32>, vector<8x2xf32> -> vector<8x167xf32>
    %268 = vector.extract_strided_slice %267 {offsets = [0, 0], sizes = [8, 165], strides = [1, 1]} : vector<8x167xf32> to vector<8x165xf32>
    %269 = vector.extract_strided_slice %267 {offsets = [0, 1], sizes = [8, 165], strides = [1, 1]} : vector<8x167xf32> to vector<8x165xf32>
    %270 = vector.extract_strided_slice %267 {offsets = [0, 2], sizes = [8, 165], strides = [1, 1]} : vector<8x167xf32> to vector<8x165xf32>
    %271 = tpu.concatenate %268, %269, %270 in 0 : vector<8x165xf32>, vector<8x165xf32>, vector<8x165xf32> -> vector<24x165xf32>
    %cst_61 = arith.constant dense<0.000000e+00> : vector<8x165xf32>
    %272 = tpu.matmul %22, %271, %cst_61 {dimension_numbers = #tpu.dot_dimension_numbers<[1], [0], [0], [1], [0, 0, 1, 1], [], []>} : vector<8x24xf32>, vector<24x165xf32>, vector<8x165xf32> -> vector<8x165xf32>
    %273 = vector.extract_strided_slice %10 {offsets = [0, 0], sizes = [8, 1], strides = [1, 1]} : vector<8x6xf32> to vector<8x1xf32>
    %274 = vector.broadcast %273 : vector<8x1xf32> to vector<8x165xf32>
    %275 = arith.addf %272, %274 : vector<8x165xf32>
    %cst_62 = arith.constant 0.000000e+00 : f32
    %276 = vector.broadcast %cst_62 : f32 to vector<8x165xf32>
    %277 = arith.maximumf %275, %276 : vector<8x165xf32>
    %278 = vector.extract_strided_slice %10 {offsets = [0, 1], sizes = [8, 1], strides = [1, 1]} : vector<8x6xf32> to vector<8x1xf32>
    %279 = vector.broadcast %278 : vector<8x1xf32> to vector<8x165xf32>
    %280 = arith.mulf %277, %279 : vector<8x165xf32>
    %281 = vector.extract_strided_slice %10 {offsets = [0, 2], sizes = [8, 1], strides = [1, 1]} : vector<8x6xf32> to vector<8x1xf32>
    %282 = vector.broadcast %281 : vector<8x1xf32> to vector<8x165xf32>
    %283 = arith.addf %280, %282 : vector<8x165xf32>
    %cst_63 = arith.constant 0.000000e+00 : f32
    %284 = vector.broadcast %cst_63 : f32 to vector<8x2xf32>
    %285 = tpu.concatenate %284, %283, %284 in 1 : vector<8x2xf32>, vector<8x165xf32>, vector<8x2xf32> -> vector<8x169xf32>
    %286 = vector.extract_strided_slice %285 {offsets = [0, 0], sizes = [8, 167], strides = [1, 1]} : vector<8x169xf32> to vector<8x167xf32>
    %287 = vector.extract_strided_slice %285 {offsets = [0, 1], sizes = [8, 167], strides = [1, 1]} : vector<8x169xf32> to vector<8x167xf32>
    %288 = vector.extract_strided_slice %285 {offsets = [0, 2], sizes = [8, 167], strides = [1, 1]} : vector<8x169xf32> to vector<8x167xf32>
    %289 = tpu.concatenate %286, %287, %288 in 0 : vector<8x167xf32>, vector<8x167xf32>, vector<8x167xf32> -> vector<24x167xf32>
    %cst_64 = arith.constant dense<0.000000e+00> : vector<8x167xf32>
    %290 = tpu.matmul %24, %289, %cst_64 {dimension_numbers = #tpu.dot_dimension_numbers<[1], [0], [0], [1], [0, 0, 1, 1], [], []>} : vector<8x24xf32>, vector<24x167xf32>, vector<8x167xf32> -> vector<8x167xf32>
    %291 = vector.extract_strided_slice %12 {offsets = [0, 0], sizes = [8, 1], strides = [1, 1]} : vector<8x6xf32> to vector<8x1xf32>
    %292 = vector.broadcast %291 : vector<8x1xf32> to vector<8x167xf32>
    %293 = arith.addf %290, %292 : vector<8x167xf32>
    %cst_65 = arith.constant 0.000000e+00 : f32
    %294 = vector.broadcast %cst_65 : f32 to vector<8x167xf32>
    %295 = arith.maximumf %293, %294 : vector<8x167xf32>
    %296 = vector.extract_strided_slice %12 {offsets = [0, 1], sizes = [8, 1], strides = [1, 1]} : vector<8x6xf32> to vector<8x1xf32>
    %297 = vector.broadcast %296 : vector<8x1xf32> to vector<8x167xf32>
    %298 = arith.mulf %295, %297 : vector<8x167xf32>
    %299 = vector.extract_strided_slice %12 {offsets = [0, 2], sizes = [8, 1], strides = [1, 1]} : vector<8x6xf32> to vector<8x1xf32>
    %300 = vector.broadcast %299 : vector<8x1xf32> to vector<8x167xf32>
    %301 = arith.addf %298, %300 : vector<8x167xf32>
    %302 = vector.extract_strided_slice %14 {offsets = [0, 3], sizes = [8, 3], strides = [1, 1]} : vector<8x6xf32> to vector<8x3xf32>
    %cst_66 = arith.constant 0.000000e+00 : f32
    %303 = vector.broadcast %cst_66 : f32 to vector<8x2xf32>
    %304 = tpu.concatenate %303, %301, %303 in 1 : vector<8x2xf32>, vector<8x167xf32>, vector<8x2xf32> -> vector<8x171xf32>
    %305 = vector.extract_strided_slice %302 {offsets = [0, 0], sizes = [8, 1], strides = [1, 1]} : vector<8x3xf32> to vector<8x1xf32>
    %306 = vector.extract_strided_slice %304 {offsets = [0, 0], sizes = [8, 169], strides = [1, 1]} : vector<8x171xf32> to vector<8x169xf32>
    %307 = vector.broadcast %305 : vector<8x1xf32> to vector<8x169xf32>
    %308 = arith.mulf %307, %306 : vector<8x169xf32>
    %309 = vector.extract_strided_slice %302 {offsets = [0, 1], sizes = [8, 1], strides = [1, 1]} : vector<8x3xf32> to vector<8x1xf32>
    %310 = vector.extract_strided_slice %304 {offsets = [0, 1], sizes = [8, 169], strides = [1, 1]} : vector<8x171xf32> to vector<8x169xf32>
    %311 = vector.broadcast %309 : vector<8x1xf32> to vector<8x169xf32>
    %312 = arith.mulf %311, %310 : vector<8x169xf32>
    %313 = arith.addf %308, %312 : vector<8x169xf32>
    %314 = vector.extract_strided_slice %302 {offsets = [0, 2], sizes = [8, 1], strides = [1, 1]} : vector<8x3xf32> to vector<8x1xf32>
    %315 = vector.extract_strided_slice %304 {offsets = [0, 2], sizes = [8, 169], strides = [1, 1]} : vector<8x171xf32> to vector<8x169xf32>
    %316 = vector.broadcast %314 : vector<8x1xf32> to vector<8x169xf32>
    %317 = arith.mulf %316, %315 : vector<8x169xf32>
    %318 = arith.addf %313, %317 : vector<8x169xf32>
    %cst_67 = arith.constant dense<0.000000e+00> : vector<169xf32>
    %319 = vector.multi_reduction <add>, %318, %cst_67 [0] : vector<8x169xf32> to vector<169xf32>
    %320 = vector.shape_cast %319 : vector<169xf32> to vector<1x169xf32>
    %321 = vector.extract_strided_slice %14 {offsets = [0, 0], sizes = [1, 1], strides = [1, 1]} : vector<8x6xf32> to vector<1x1xf32>
    %322 = vector.broadcast %321 : vector<1x1xf32> to vector<1x169xf32>
    %323 = arith.addf %320, %322 : vector<1x169xf32>
    %cst_68 = arith.constant 0.000000e+00 : f32
    %324 = vector.broadcast %cst_68 : f32 to vector<1x169xf32>
    %325 = arith.maximumf %323, %324 : vector<1x169xf32>
    %326 = vector.extract_strided_slice %14 {offsets = [0, 1], sizes = [1, 1], strides = [1, 1]} : vector<8x6xf32> to vector<1x1xf32>
    %327 = vector.broadcast %326 : vector<1x1xf32> to vector<1x169xf32>
    %328 = arith.mulf %325, %327 : vector<1x169xf32>
    %329 = vector.extract_strided_slice %14 {offsets = [0, 2], sizes = [1, 1], strides = [1, 1]} : vector<8x6xf32> to vector<1x1xf32>
    %330 = vector.broadcast %329 : vector<1x1xf32> to vector<1x169xf32>
    %331 = arith.addf %328, %330 : vector<1x169xf32>
    %cst_69 = arith.constant 0.000000e+00 : f32
    %332 = vector.broadcast %cst_69 : f32 to vector<1x86xf32>
    %333 = tpu.concatenate %331, %332, %265 in 1 : vector<1x169xf32>, vector<1x86xf32>, vector<1x1xf32> -> vector<1x256xf32>
    %334 = tpu.concatenate %179, %333 in 0 : vector<1x256xf32>, vector<1x256xf32> -> vector<2x256xf32>
    %c0_70 = arith.constant 0 : index
    %c0_71 = arith.constant 0 : index
    %c0_72 = arith.constant 0 : index
    %335 = vector.load %arg5[%c0_70, %c0_71, %c0_72] : memref<1x2x256xf32, #tpu.memory_space<vmem>>, vector<1x2x256xf32>
    %336 = vector.shape_cast %335 : vector<1x2x256xf32> to vector<2x256xf32>
    %337 = vector.shape_cast %334 : vector<2x256xf32> to vector<1x2x256xf32>
    tpu.vector_store %arg5[%c0_70, %c0_71, %c0_72], %337 {strides = array<i32>} : memref<1x2x256xf32, #tpu.memory_space<vmem>>, vector<1x2x256xf32>,
    return
  }
  func.func @transform_0(%arg0: i32) -> (i32, i32, i32) {
    %c0_i32 = arith.constant 0 : i32
    %c0_i32_0 = arith.constant 0 : i32
    %c0_i32_1 = arith.constant 0 : i32
    return %arg0, %c0_i32, %c0_i32_0 : i32, i32, i32
  }
  func.func @transform_1(%arg0: i32) -> (i32, i32, i32) {
    %c0_i32 = arith.constant 0 : i32
    %c0_i32_0 = arith.constant 0 : i32
    %c0_i32_1 = arith.constant 0 : i32
    %c0_i32_2 = arith.constant 0 : i32
    return %c0_i32, %c0_i32_0, %c0_i32_1 : i32, i32, i32
  }
  func.func @transform_2(%arg0: i32) -> (i32, i32, i32) {
    %c0_i32 = arith.constant 0 : i32
    %c0_i32_0 = arith.constant 0 : i32
    %c0_i32_1 = arith.constant 0 : i32
    %c0_i32_2 = arith.constant 0 : i32
    return %c0_i32, %c0_i32_0, %c0_i32_1 : i32, i32, i32
  }
  func.func @transform_3(%arg0: i32) -> (i32, i32) {
    %c0_i32 = arith.constant 0 : i32
    %c0_i32_0 = arith.constant 0 : i32
    %c0_i32_1 = arith.constant 0 : i32
    return %c0_i32, %c0_i32_0 : i32, i32
  }
  func.func @transform_4(%arg0: i32) -> (i32, i32, i32) {
    %c0_i32 = arith.constant 0 : i32
    %c0_i32_0 = arith.constant 0 : i32
    %c0_i32_1 = arith.constant 0 : i32
    return %arg0, %c0_i32, %c0_i32_0 : i32, i32, i32
  }
}

</mosaic_0001>

<llo_original>
// kernel: tpu_custom_call.1
$region0: #{tpu_custom_call.1}
  #allocation0 [shape = 'u32[]', space=smem, size = 0x4, offset = 0x4, fixed_abs, tag = 'smem constant byte address 0x4 - core index']
  #allocation1 [shape = 'u32[144,128]{1,0:T(1,128)}', space=vmem, size = 0x12000, scoped, tag = 'internal scratch']
  %s0 = inlined_call_operand.vmem [shape: f32[1,2,169], index: 0, kind: input, shape index: {}]
  %s1 = inlined_call_operand.vmem [shape: f32[4,8,24], index: 1, kind: input, shape index: {}]
  %s2 = inlined_call_operand.vmem [shape: f32[7,8,6], index: 2, kind: input, shape index: {}]
  %s3 = inlined_call_operand.vmem [shape: f32[8,163], index: 3, kind: input, shape index: {}]
  %s4 = inlined_call_operand.hbm [shape: f32[1,2,256], index: 4, kind: output, shape index: {}]
  %s5 = sld [smem:[#allocation0]]
  $region26: #{tpu_custom_call.1} parent=0
    _
  %s7 = ssub.s32 1, %s5
  %s8 = scalar_select 0, %s7, %s5
  $region1: #{tpu_custom_call.1} parent=0
    #allocation2 [shape = 'u8[2048]{0}', space=vmem, size = 0x800, scoped, tag = 'output window, operand 0, single buffered']
    #allocation3 [shape = 's32[1]{0}', space=sflag, size = 0x4, scoped, tag = 'scoped memory for tpu_custom_call.1']
    %9 = vsyncpa [#allocation3], 0
    // Predicated region
    $region2: #{tpu_custom_call.1} parent=1 // pred_check
      _
    $region3: #{tpu_custom_call.1} parent=1 // pred_check_branch
      %11 = sbr.rel (0) target = $region5
    $region4: #{tpu_custom_call.1} parent=1 // pred_region
      _
    $region5: #{tpu_custom_call.1} parent=1 // pred_fallthru
      _
    // Predicated region
    $region6: #{tpu_custom_call.1} parent=1 // pred_check
      _
    $region7: #{tpu_custom_call.1} parent=1 // pred_check_branch
      %13 = sbr.rel (0) target = $region9
    $region8: #{tpu_custom_call.1} parent=1 // pred_region
      _
    $region9: #{tpu_custom_call.1} parent=1 // pred_fallthru
      _
    // Predicated region
    $region10: #{tpu_custom_call.1} parent=1 // pred_check
      _
    $region11: #{tpu_custom_call.1} parent=1 // pred_check_branch
      %15 = sbr.rel (0) target = $region13
    $region12: #{tpu_custom_call.1} parent=1 // pred_region
      _
    $region13: #{tpu_custom_call.1} parent=1 // pred_fallthru
      _
    // Predicated region
    $region14: #{tpu_custom_call.1} parent=1 // pred_check
      _
    $region15: #{tpu_custom_call.1} parent=1 // pred_check_branch
      %17 = sbr.rel (0) target = $region17
    $region16: #{tpu_custom_call.1} parent=1 // pred_region
      _
    $region17: #{tpu_custom_call.1} parent=1 // pred_fallthru
      _
    %v18 = vld [vmem:[%s0] sm:$0xf]
    %v19 = vld [vmem:[%s3] sm:$0xff]
    %v20 = vld [vmem:[%s3 + $0x8] sm:$0xff]
    %v21 = vld [vmem:[%s2] sm:$0xff]
    %s22 = scalar_lea.vmem %s2, 8
    %v23 = vld [vmem:[%s22] sm:$0xff]
    %s24 = scalar_lea.vmem %s2, 16
    %v25 = vld [vmem:[%s24] sm:$0xff]
    %s26 = scalar_lea.vmem %s2, 24
    %v27 = vld [vmem:[%s26] sm:$0xff]
    %s28 = scalar_lea.vmem %s2, 32
    %v29 = vld [vmem:[%s28] sm:$0xff]
    %s30 = scalar_lea.vmem %s2, 40
    %v31 = vld [vmem:[%s30] sm:$0xff]
    %s32 = scalar_lea.vmem %s2, 48
    %v33 = vld [vmem:[%s32] sm:$0xff]
    %v34 = vld [vmem:[%s1] sm:$0xff]
    %s35 = scalar_lea.vmem %s1, 8
    %v36 = vld [vmem:[%s35] sm:$0xff]
    %s37 = scalar_lea.vmem %s1, 16
    %v38 = vld [vmem:[%s37] sm:$0xff]
    %s39 = scalar_lea.vmem %s1, 24
    %v40 = vld [vmem:[%s39] sm:$0xff]
    %42 = vset.pattern.permute.xlu0 3
    %43 = vperm.xlu0 %42, %v21
    %v44 = vpop.permute.xlu0 %43
    %v47 = vlaneseq
    %v48 = vshrl.u32 %v47, 7
    %v49 = vsub.s32 0, %v48
    %v50 = vrot.slane %v18, %v49
    %v51 = vlaneseq
    %v52 = vshrl.u32 %v51, 7
    %v53 = vsub.s32 2, %v52
    %v54 = vrot.slane %v18, %v53
    %v57 = vlaneseq
    %v58 = vshrl.u32 %v57, 7
    %v59 = vsub.s32 0, %v58
    %v60 = vrot.slane %v50, %v59
    %v61 = vlaneseq
    %v62 = vshrl.u32 %v61, 7
    %v63 = vsub.s32 0, %v62
    %v64 = vrot.slane %v54, %v63
    %v65 = vmul.f32 %v44, %v60
    %v66 = vmul.f32 %v44, %v64
    %67 = vset.pattern.permute.xlu0 4
    %68 = vperm.xlu0 %67, %v21
    %v69 = vpop.permute.xlu0 %68
    %v71 = vmul.f32 %v69, %v60
    %v72 = vmul.f32 %v69, %v64
    %75 = vrot.lane.b32.xlu0 %v71, 127
    %v76 = vpop.permute.xlu0 %75
    %77 = vrot.lane.b32.xlu0 %v72, 127
    %v78 = vpop.permute.xlu0 %77
    %vm79 = vcmask 1039360
    %v80 = vsel %vm79, %v76, %v78
    %v83 = vadd.f32 %v65, %v80
    %v84 = vadd.f32 %v66, %v78
    %85 = vset.pattern.permute.xlu0 5
    %86 = vperm.xlu0 %85, %v21
    %v87 = vpop.permute.xlu0 %86
    %v89 = vmul.f32 %v87, %v60
    %v90 = vmul.f32 %v87, %v64
    %93 = vrot.lane.b32.xlu0 %v89, 126
    %v94 = vpop.permute.xlu0 %93
    %95 = vrot.lane.b32.xlu0 %v90, 126
    %v96 = vpop.permute.xlu0 %95
    %vm97 = vcmask 1031168
    %v98 = vsel %vm97, %v94, %v96
    %v101 = vadd.f32 %v83, %v98
    %v102 = vadd.f32 %v84, %v96
    %103 = vset.pattern.permute.xlu0 0
    %104 = vperm.xlu0 %103, %v21
    %v105 = vpop.permute.xlu0 %104
    %v107 = vadd.f32 %v101, %v105
    %v108 = vadd.f32 %v102, %v105
    %v109 = vmax.f32 %v107, 0.0
    %v110 = vmax.f32 %v108, 0.0
    %111 = vset.pattern.permute.xlu0 1
    %112 = vperm.xlu0 %111, %v21
    %v113 = vpop.permute.xlu0 %112
    %v115 = vmul.f32 %v109, %v113
    %v116 = vmul.f32 %v110, %v113
    %117 = vset.pattern.permute.xlu0 2
    %118 = vperm.xlu0 %117, %v21
    %v119 = vpop.permute.xlu0 %118
    %v121 = vadd.f32 %v115, %v119
    %v122 = vadd.f32 %v116, %v119
    %125 = vrot.lane.b32.xlu0 %v121, 1
    %v126 = vpop.permute.xlu0 %125
    %127 = vrot.lane.b32.xlu0 %v122, 1
    %v128 = vpop.permute.xlu0 %127
    %vm129 = vcmask 7168
    %v130 = vsel %vm129, %v126, %v128
    %v133 = vsel %vm129, -inf, %v126
    %vm134 = vcmask 326656
    %v135 = vsel %vm134, %v130, -inf
    %v136 = vmax.f32 %v121, %v133
    %v137 = vmax.f32 %v122, %v135
    %140 = vrot.lane.b32.xlu0 %v133, 126
    %v141 = vpop.permute.xlu0 %140
    %142 = vrot.lane.b32.xlu0 %v135, 126
    %v143 = vpop.permute.xlu0 %142
    %v144 = vsel %vm97, %v141, %v143
    %v147 = vmax.f32 %v136, %v144
    %v148 = vmax.f32 %v137, %v143
    %151 = vrot.lane.b32.xlu0 %v147, 127
    %v152 = vpop.permute.xlu0 %151
    %153 = vrot.lane.b32.xlu0 %v148, 127
    %v154 = vpop.permute.xlu0 %153
    %v155 = vsel %vm79, %v152, %v154
    %158 = vrot.lane.b32.xlu0 %v147, 126
    %v159 = vpop.permute.xlu0 %158
    %160 = vrot.lane.b32.xlu0 %v148, 126
    %v161 = vpop.permute.xlu0 %160
    %v162 = vsel %vm97, %v159, %v161
    %166 = vset.pattern.permute.xlu0 0
    %167 = vperm.xlu0 %166, %v23
    %v168 = vpop.permute.xlu0 %167
    %vm170 = vcmask 195584
    %v172 = vsel %vm170, %v34, 0
    %174 = vmatprep.subr.mxu0 %v148
    %175 = vmatpush1.msra.mxu0 %v147
    %176 = vmatprep.subr.mxu0 %v154
    %177 = vmatpush1.msra.mxu0 %v155
    %178 = vmatprep.subr.mxu0 %v161
    %179 = vmatpush1.msra.mxu0 %v162
    %180 = vmatprep.subr.mxu0 0.0
    %181 = vmatpush1.msra.mxu0 0.0
    %182 = vmatprep.subr.mxu0 0.0
    %183 = vmatpush1.msra.mxu0 0.0
    %184 = vmatprep.subr.mxu0 0.0
    %185 = vmatpush1.msra.mxu0 0.0
    %186 = vmatprep.subr.mxu0 0.0
    %187 = vmatpush1.msra.mxu0 0.0
    %188 = vmatprep.subr.mxu0 0.0
    %189 = vmatpush1.msra.mxu0 0.0
    %190 = vmatprep.subr.mxu0 0.0
    %191 = vmatpush1.msra.mxu0 0.0
    %192 = vmatprep.subr.mxu0 0.0
    %193 = vmatpush1.msra.mxu0 0.0
    %194 = vmatprep.subr.mxu0 0.0
    %195 = vmatpush1.msra.mxu0 0.0
    %196 = vmatprep.subr.mxu0 0.0
    %197 = vmatpush1.msra.mxu0 0.0
    %198 = vmatprep.subr.mxu0 0.0
    %199 = vmatpush1.msra.mxu0 0.0
    %200 = vmatprep.subr.mxu0 0.0
    %201 = vmatpush1.msra.mxu0 0.0
    %202 = vmatprep.subr.mxu0 0.0
    %203 = vmatpush1.msra.mxu0 0.0
    %204 = vmatprep.subr.mxu0 0.0
    %205 = vmatpush1.msra.mxu0 0.0
    %206 = vmatprep.subr.mxu0 0.0
    %207 = vmatpush1.msra.mxu0 0.0
    %208 = vmatprep.subr.mxu0 0.0
    %209 = vmatpush1.msra.mxu0 0.0
    %210 = vmatprep.subr.mxu0 0.0
    %211 = vmatpush1.msra.mxu0 0.0
    %212 = vmatprep.subr.mxu0 0.0
    %213 = vmatpush1.msra.mxu0 0.0
    %214 = vmatprep.subr.mxu0 0.0
    %215 = vmatpush1.msra.mxu0 0.0
    %216 = vmatprep.subr.mxu0 0.0
    %217 = vmatpush1.msra.mxu0 0.0
    %218 = vmatprep.subr.mxu0 0.0
    %219 = vmatpush1.msra.mxu0 0.0
    %220 = vmatprep.subr.mxu0 0.0
    %221 = vmatpush1.msra.mxu0 0.0
    %222 = vmatprep.subr.mxu0 0.0
    %223 = vmatpush1.msra.mxu0 0.0
    %224 = vmatprep.subr.mxu0 0.0
    %225 = vmatpush1.msra.mxu0 0.0
    %226 = vmatprep.subr.mxu0 0.0
    %227 = vmatpush1.msra.mxu0 0.0
    %228 = vmatprep.subr.mxu0 0.0
    %229 = vmatpush1.msra.mxu0 0.0
    %230 = vmatprep.subr.mxu0 0.0
    %231 = vmatpush1.msra.mxu0 0.0
    %232 = vmatprep.subr.mxu0 0.0
    %233 = vmatpush1.msra.mxu0 0.0
    %234 = vmatprep.subr.mxu0 0.0
    %235 = vmatpush1.msra.mxu0 0.0
    %236 = vmatprep.subr.mxu0 0.0
    %237 = vmatpush1.msra.mxu0 0.0
    %238 = vmatprep.mubr.f32.mxu0 0.0
    %239 = vmatmul.mubr.f32.gmra.mrb[0].mxu0 %v172
    %v240 = vpop.f32.mrb[0].mxu0
    %v241 = vadd.f32 %v168, %v240
    %v242 = vpop.f32.mrb[0].mxu0
    %v243 = vadd.f32 %v168, %v242
    %244 = vdwg.mxu0
    %v245 = vmax.f32 %v241, 0.0
    %v246 = vmax.f32 %v243, 0.0
    %247 = vset.pattern.permute.xlu0 1
    %248 = vperm.xlu0 %247, %v23
    %v249 = vpop.permute.xlu0 %248
    %v251 = vmul.f32 %v245, %v249
    %v252 = vmul.f32 %v246, %v249
    %253 = vset.pattern.permute.xlu0 2
    %254 = vperm.xlu0 %253, %v23
    %v255 = vpop.permute.xlu0 %254
    %v257 = vadd.f32 %v251, %v255
    %v258 = vadd.f32 %v252, %v255
    %261 = vrot.lane.b32.xlu0 %v257, 1
    %v262 = vpop.permute.xlu0 %261
    %263 = vrot.lane.b32.xlu0 %v258, 1
    %v264 = vpop.permute.xlu0 %263
    %v265 = vsel %vm129, %v262, %v264
    %v268 = vsel %vm129, -inf, %v262
    %vm269 = vcmask 310272
    %v270 = vsel %vm269, %v265, -inf
    %v271 = vmax.f32 %v257, %v268
    %v272 = vmax.f32 %v258, %v270
    %275 = vrot.lane.b32.xlu0 %v268, 126
    %v276 = vpop.permute.xlu0 %275
    %277 = vrot.lane.b32.xlu0 %v270, 126
    %v278 = vpop.permute.xlu0 %277
    %v279 = vsel %vm97, %v276, %v278
    %v282 = vmax.f32 %v271, %v279
    %v283 = vmax.f32 %v272, %v278
    %286 = vrot.lane.b32.xlu0 %v282, 127
    %v287 = vpop.permute.xlu0 %286
    %288 = vrot.lane.b32.xlu0 %v283, 127
    %v289 = vpop.permute.xlu0 %288
    %v290 = vsel %vm79, %v287, %v289
    %293 = vrot.lane.b32.xlu0 %v282, 126
    %v294 = vpop.permute.xlu0 %293
    %295 = vrot.lane.b32.xlu0 %v283, 126
    %v296 = vpop.permute.xlu0 %295
    %v297 = vsel %vm97, %v294, %v296
    %301 = vset.pattern.permute.xlu0 0
    %302 = vperm.xlu0 %301, %v25
    %v303 = vpop.permute.xlu0 %302
    %v306 = vsel %vm170, %v36, 0
    %308 = vmatprep.subr.mxu0 %v283
    %309 = vmatpush1.msra.mxu0 %v282
    %310 = vmatprep.subr.mxu0 %v289
    %311 = vmatpush1.msra.mxu0 %v290
    %312 = vmatprep.subr.mxu0 %v296
    %313 = vmatpush1.msra.mxu0 %v297
    %314 = vmatprep.subr.mxu0 0.0
    %315 = vmatpush1.msra.mxu0 0.0
    %316 = vmatprep.subr.mxu0 0.0
    %317 = vmatpush1.msra.mxu0 0.0
    %318 = vmatprep.subr.mxu0 0.0
    %319 = vmatpush1.msra.mxu0 0.0
    %320 = vmatprep.subr.mxu0 0.0
    %321 = vmatpush1.msra.mxu0 0.0
    %322 = vmatprep.subr.mxu0 0.0
    %323 = vmatpush1.msra.mxu0 0.0
    %324 = vmatprep.subr.mxu0 0.0
    %325 = vmatpush1.msra.mxu0 0.0
    %326 = vmatprep.subr.mxu0 0.0
    %327 = vmatpush1.msra.mxu0 0.0
    %328 = vmatprep.subr.mxu0 0.0
    %329 = vmatpush1.msra.mxu0 0.0
    %330 = vmatprep.subr.mxu0 0.0
    %331 = vmatpush1.msra.mxu0 0.0
    %332 = vmatprep.subr.mxu0 0.0
    %333 = vmatpush1.msra.mxu0 0.0
    %334 = vmatprep.subr.mxu0 0.0
    %335 = vmatpush1.msra.mxu0 0.0
    %336 = vmatprep.subr.mxu0 0.0
    %337 = vmatpush1.msra.mxu0 0.0
    %338 = vmatprep.subr.mxu0 0.0
    %339 = vmatpush1.msra.mxu0 0.0
    %340 = vmatprep.subr.mxu0 0.0
    %341 = vmatpush1.msra.mxu0 0.0
    %342 = vmatprep.subr.mxu0 0.0
    %343 = vmatpush1.msra.mxu0 0.0
    %344 = vmatprep.subr.mxu0 0.0
    %345 = vmatpush1.msra.mxu0 0.0
    %346 = vmatprep.subr.mxu0 0.0
    %347 = vmatpush1.msra.mxu0 0.0
    %348 = vmatprep.subr.mxu0 0.0
    %349 = vmatpush1.msra.mxu0 0.0
    %350 = vmatprep.subr.mxu0 0.0
    %351 = vmatpush1.msra.mxu0 0.0
    %352 = vmatprep.subr.mxu0 0.0
    %353 = vmatpush1.msra.mxu0 0.0
    %354 = vmatprep.subr.mxu0 0.0
    %355 = vmatpush1.msra.mxu0 0.0
    %356 = vmatprep.subr.mxu0 0.0
    %357 = vmatpush1.msra.mxu0 0.0
    %358 = vmatprep.subr.mxu0 0.0
    %359 = vmatpush1.msra.mxu0 0.0
    %360 = vmatprep.subr.mxu0 0.0
    %361 = vmatpush1.msra.mxu0 0.0
    %362 = vmatprep.subr.mxu0 0.0
    %363 = vmatpush1.msra.mxu0 0.0
    %364 = vmatprep.subr.mxu0 0.0
    %365 = vmatpush1.msra.mxu0 0.0
    %366 = vmatprep.subr.mxu0 0.0
    %367 = vmatpush1.msra.mxu0 0.0
    %368 = vmatprep.subr.mxu0 0.0
    %369 = vmatpush1.msra.mxu0 0.0
    %370 = vmatprep.subr.mxu0 0.0
    %371 = vmatpush1.msra.mxu0 0.0
    %372 = vmatprep.mubr.f32.mxu0 0.0
    %373 = vmatmul.mubr.f32.gmra.mrb[0].mxu0 %v306
    %v374 = vpop.f32.mrb[0].mxu0
    %v375 = vadd.f32 %v303, %v374
    %v376 = vpop.f32.mrb[0].mxu0
    %v377 = vadd.f32 %v303, %v376
    %378 = vdwg.mxu0
    %v379 = vmax.f32 %v375, 0.0
    %v380 = vmax.f32 %v377, 0.0
    %381 = vset.pattern.permute.xlu0 1
    %382 = vperm.xlu0 %381, %v25
    %v383 = vpop.permute.xlu0 %382
    %v385 = vmul.f32 %v379, %v383
    %v386 = vmul.f32 %v380, %v383
    %387 = vset.pattern.permute.xlu0 2
    %388 = vperm.xlu0 %387, %v25
    %v389 = vpop.permute.xlu0 %388
    %v391 = vadd.f32 %v385, %v389
    %v392 = vadd.f32 %v386, %v389
    %395 = vrot.lane.b32.xlu0 %v391, 1
    %v396 = vpop.permute.xlu0 %395
    %397 = vrot.lane.b32.xlu0 %v392, 1
    %v398 = vpop.permute.xlu0 %397
    %v399 = vsel %vm129, %v396, %v398
    %v402 = vsel %vm129, -inf, %v396
    %vm403 = vcmask 293888
    %v404 = vsel %vm403, %v399, -inf
    %v405 = vmax.f32 %v391, %v402
    %v406 = vmax.f32 %v392, %v404
    %409 = vrot.lane.b32.xlu0 %v402, 126
    %v410 = vpop.permute.xlu0 %409
    %411 = vrot.lane.b32.xlu0 %v404, 126
    %v412 = vpop.permute.xlu0 %411
    %v413 = vsel %vm97, %v410, %v412
    %v416 = vmax.f32 %v405, %v413
    %v417 = vmax.f32 %v406, %v412
    %v418 = vmul.f32 %v416, %v19
    %v419 = vmul.f32 %v417, %v20
    %vm420 = vcmask 285696
    %v421 = vsel %vm420, %v419, 0.0
    %v422 = vadd.f32 %v418, %v421
    %423 = vadd.xlane.f32.xlu0 %v422
    %v424 = vpop.xlane.xlu0 %423
    %v425 = vrot.slane %v424, 4
    %v426 = vadd.f32 %v424, %v425
    %v427 = vrot.slane %v426, 2
    %v428 = vadd.f32 %v426, %v427
    %v429 = vrot.slane %v428, 1
    %v430 = vadd.f32 %v428, %v429
    %v431 = vadd.f32 %v430, %v33
    %434 = vrot.lane.b32.xlu0 %v416, 2
    %v435 = vpop.permute.xlu0 %434
    %436 = vrot.lane.b32.xlu0 %v417, 2
    %v437 = vpop.permute.xlu0 %436
    %vm438 = vcmask 15360
    %v439 = vsel %vm438, %v435, %v437
    %v442 = vsel %vm438, 0.0, %v435
    %vm443 = vcmask 302080
    %v444 = vsel %vm443, %v439, 0.0
    %447 = vrot.lane.b32.xlu0 %v442, 127
    %v448 = vpop.permute.xlu0 %447
    %449 = vrot.lane.b32.xlu0 %v444, 127
    %v450 = vpop.permute.xlu0 %449
    %v451 = vsel %vm79, %v448, %v450
    %454 = vrot.lane.b32.xlu0 %v442, 126
    %v455 = vpop.permute.xlu0 %454
    %456 = vrot.lane.b32.xlu0 %v444, 126
    %v457 = vpop.permute.xlu0 %456
    %v458 = vsel %vm97, %v455, %v457
    %462 = vset.pattern.permute.xlu0 0
    %463 = vperm.xlu0 %462, %v27
    %v464 = vpop.permute.xlu0 %463
    %v467 = vsel %vm170, %v38, 0
    %469 = vmatprep.subr.mxu0 %v444
    %470 = vmatpush1.msra.mxu0 %v442
    %471 = vmatprep.subr.mxu0 %v450
    %472 = vmatpush1.msra.mxu0 %v451
    %473 = vmatprep.subr.mxu0 %v457
    %474 = vmatpush1.msra.mxu0 %v458
    %475 = vmatprep.subr.mxu0 0.0
    %476 = vmatpush1.msra.mxu0 0.0
    %477 = vmatprep.subr.mxu0 0.0
    %478 = vmatpush1.msra.mxu0 0.0
    %479 = vmatprep.subr.mxu0 0.0
    %480 = vmatpush1.msra.mxu0 0.0
    %481 = vmatprep.subr.mxu0 0.0
    %482 = vmatpush1.msra.mxu0 0.0
    %483 = vmatprep.subr.mxu0 0.0
    %484 = vmatpush1.msra.mxu0 0.0
    %485 = vmatprep.subr.mxu0 0.0
    %486 = vmatpush1.msra.mxu0 0.0
    %487 = vmatprep.subr.mxu0 0.0
    %488 = vmatpush1.msra.mxu0 0.0
    %489 = vmatprep.subr.mxu0 0.0
    %490 = vmatpush1.msra.mxu0 0.0
    %491 = vmatprep.subr.mxu0 0.0
    %492 = vmatpush1.msra.mxu0 0.0
    %493 = vmatprep.subr.mxu0 0.0
    %494 = vmatpush1.msra.mxu0 0.0
    %495 = vmatprep.subr.mxu0 0.0
    %496 = vmatpush1.msra.mxu0 0.0
    %497 = vmatprep.subr.mxu0 0.0
    %498 = vmatpush1.msra.mxu0 0.0
    %499 = vmatprep.subr.mxu0 0.0
    %500 = vmatpush1.msra.mxu0 0.0
    %501 = vmatprep.subr.mxu0 0.0
    %502 = vmatpush1.msra.mxu0 0.0
    %503 = vmatprep.subr.mxu0 0.0
    %504 = vmatpush1.msra.mxu0 0.0
    %505 = vmatprep.subr.mxu0 0.0
    %506 = vmatpush1.msra.mxu0 0.0
    %507 = vmatprep.subr.mxu0 0.0
    %508 = vmatpush1.msra.mxu0 0.0
    %509 = vmatprep.subr.mxu0 0.0
    %510 = vmatpush1.msra.mxu0 0.0
    %511 = vmatprep.subr.mxu0 0.0
    %512 = vmatpush1.msra.mxu0 0.0
    %513 = vmatprep.subr.mxu0 0.0
    %514 = vmatpush1.msra.mxu0 0.0
    %515 = vmatprep.subr.mxu0 0.0
    %516 = vmatpush1.msra.mxu0 0.0
    %517 = vmatprep.subr.mxu0 0.0
    %518 = vmatpush1.msra.mxu0 0.0
    %519 = vmatprep.subr.mxu0 0.0
    %520 = vmatpush1.msra.mxu0 0.0
    %521 = vmatprep.subr.mxu0 0.0
    %522 = vmatpush1.msra.mxu0 0.0
    %523 = vmatprep.subr.mxu0 0.0
    %524 = vmatpush1.msra.mxu0 0.0
    %525 = vmatprep.subr.mxu0 0.0
    %526 = vmatpush1.msra.mxu0 0.0
    %527 = vmatprep.subr.mxu0 0.0
    %528 = vmatpush1.msra.mxu0 0.0
    %529 = vmatprep.subr.mxu0 0.0
    %530 = vmatpush1.msra.mxu0 0.0
    %531 = vmatprep.subr.mxu0 0.0
    %532 = vmatpush1.msra.mxu0 0.0
    %533 = vmatprep.mubr.f32.mxu0 0.0
    %534 = vmatmul.mubr.f32.gmra.mrb[0].mxu0 %v467
    %v535 = vpop.f32.mrb[0].mxu0
    %v536 = vadd.f32 %v464, %v535
    %v537 = vpop.f32.mrb[0].mxu0
    %v538 = vadd.f32 %v464, %v537
    %539 = vdwg.mxu0
    %v540 = vmax.f32 %v536, 0.0
    %v541 = vmax.f32 %v538, 0.0
    %542 = vset.pattern.permute.xlu0 1
    %543 = vperm.xlu0 %542, %v27
    %v544 = vpop.permute.xlu0 %543
    %v546 = vmul.f32 %v540, %v544
    %v547 = vmul.f32 %v541, %v544
    %548 = vset.pattern.permute.xlu0 2
    %549 = vperm.xlu0 %548, %v27
    %v550 = vpop.permute.xlu0 %549
    %v552 = vadd.f32 %v546, %v550
    %v553 = vadd.f32 %v547, %v550
    %556 = vrot.lane.b32.xlu0 %v552, 2
    %v557 = vpop.permute.xlu0 %556
    %558 = vrot.lane.b32.xlu0 %v553, 2
    %v559 = vpop.permute.xlu0 %558
    %v560 = vsel %vm438, %v557, %v559
    %v563 = vsel %vm438, 0.0, %v557
    %vm564 = vcmask 318464
    %v565 = vsel %vm564, %v560, 0.0
    %568 = vrot.lane.b32.xlu0 %v563, 127
    %v569 = vpop.permute.xlu0 %568
    %570 = vrot.lane.b32.xlu0 %v565, 127
    %v571 = vpop.permute.xlu0 %570
    %v572 = vsel %vm79, %v569, %v571
    %575 = vrot.lane.b32.xlu0 %v563, 126
    %v576 = vpop.permute.xlu0 %575
    %577 = vrot.lane.b32.xlu0 %v565, 126
    %v578 = vpop.permute.xlu0 %577
    %v579 = vsel %vm97, %v576, %v578
    %583 = vset.pattern.permute.xlu0 0
    %584 = vperm.xlu0 %583, %v29
    %v585 = vpop.permute.xlu0 %584
    %v588 = vsel %vm170, %v40, 0
    %590 = vmatprep.subr.mxu0 %v565
    %591 = vmatpush1.msra.mxu0 %v563
    %592 = vmatprep.subr.mxu0 %v571
    %593 = vmatpush1.msra.mxu0 %v572
    %594 = vmatprep.subr.mxu0 %v578
    %595 = vmatpush1.msra.mxu0 %v579
    %596 = vmatprep.subr.mxu0 0.0
    %597 = vmatpush1.msra.mxu0 0.0
    %598 = vmatprep.subr.mxu0 0.0
    %599 = vmatpush1.msra.mxu0 0.0
    %600 = vmatprep.subr.mxu0 0.0
    %601 = vmatpush1.msra.mxu0 0.0
    %602 = vmatprep.subr.mxu0 0.0
    %603 = vmatpush1.msra.mxu0 0.0
    %604 = vmatprep.subr.mxu0 0.0
    %605 = vmatpush1.msra.mxu0 0.0
    %606 = vmatprep.subr.mxu0 0.0
    %607 = vmatpush1.msra.mxu0 0.0
    %608 = vmatprep.subr.mxu0 0.0
    %609 = vmatpush1.msra.mxu0 0.0
    %610 = vmatprep.subr.mxu0 0.0
    %611 = vmatpush1.msra.mxu0 0.0
    %612 = vmatprep.subr.mxu0 0.0
    %613 = vmatpush1.msra.mxu0 0.0
    %614 = vmatprep.subr.mxu0 0.0
    %615 = vmatpush1.msra.mxu0 0.0
    %616 = vmatprep.subr.mxu0 0.0
    %617 = vmatpush1.msra.mxu0 0.0
    %618 = vmatprep.subr.mxu0 0.0
    %619 = vmatpush1.msra.mxu0 0.0
    %620 = vmatprep.subr.mxu0 0.0
    %621 = vmatpush1.msra.mxu0 0.0
    %622 = vmatprep.subr.mxu0 0.0
    %623 = vmatpush1.msra.mxu0 0.0
    %624 = vmatprep.subr.mxu0 0.0
    %625 = vmatpush1.msra.mxu0 0.0
    %626 = vmatprep.subr.mxu0 0.0
    %627 = vmatpush1.msra.mxu0 0.0
    %628 = vmatprep.subr.mxu0 0.0
    %629 = vmatpush1.msra.mxu0 0.0
    %630 = vmatprep.subr.mxu0 0.0
    %631 = vmatpush1.msra.mxu0 0.0
    %632 = vmatprep.subr.mxu0 0.0
    %633 = vmatpush1.msra.mxu0 0.0
    %634 = vmatprep.subr.mxu0 0.0
    %635 = vmatpush1.msra.mxu0 0.0
    %636 = vmatprep.subr.mxu0 0.0
    %637 = vmatpush1.msra.mxu0 0.0
    %638 = vmatprep.subr.mxu0 0.0
    %639 = vmatpush1.msra.mxu0 0.0
    %640 = vmatprep.subr.mxu0 0.0
    %641 = vmatpush1.msra.mxu0 0.0
    %642 = vmatprep.subr.mxu0 0.0
    %643 = vmatpush1.msra.mxu0 0.0
    %644 = vmatprep.subr.mxu0 0.0
    %645 = vmatpush1.msra.mxu0 0.0
    %646 = vmatprep.subr.mxu0 0.0
    %647 = vmatpush1.msra.mxu0 0.0
    %648 = vmatprep.subr.mxu0 0.0
    %649 = vmatpush1.msra.mxu0 0.0
    %650 = vmatprep.subr.mxu0 0.0
    %651 = vmatpush1.msra.mxu0 0.0
    %652 = vmatprep.subr.mxu0 0.0
    %653 = vmatpush1.msra.mxu0 0.0
    %654 = vmatprep.mubr.f32.mxu0 0.0
    %655 = vmatmul.mubr.f32.gmra.mrb[0].mxu0 %v588
    %v656 = vpop.f32.mrb[0].mxu0
    %v657 = vadd.f32 %v585, %v656
    %v658 = vpop.f32.mrb[0].mxu0
    %v659 = vadd.f32 %v585, %v658
    %660 = vdwg.mxu0
    %v661 = vmax.f32 %v657, 0.0
    %v662 = vmax.f32 %v659, 0.0
    %663 = vset.pattern.permute.xlu0 1
    %664 = vperm.xlu0 %663, %v29
    %v665 = vpop.permute.xlu0 %664
    %v667 = vmul.f32 %v661, %v665
    %v668 = vmul.f32 %v662, %v665
    %669 = vset.pattern.permute.xlu0 2
    %670 = vperm.xlu0 %669, %v29
    %v671 = vpop.permute.xlu0 %670
    %v673 = vadd.f32 %v667, %v671
    %v674 = vadd.f32 %v668, %v671
    %677 = vrot.lane.b32.xlu0 %v673, 2
    %v678 = vpop.permute.xlu0 %677
    %679 = vrot.lane.b32.xlu0 %v674, 2
    %v680 = vpop.permute.xlu0 %679
    %v681 = vsel %vm438, %v678, %v680
    %v684 = vsel %vm438, 0.0, %v678
    %vm685 = vcmask 334848
    %v686 = vsel %vm685, %v681, 0.0
    %688 = vset.pattern.permute.xlu0 3
    %689 = vperm.xlu0 %688, %v31
    %v690 = vpop.permute.xlu0 %689
    %v692 = vmul.f32 %v690, %v684
    %v693 = vmul.f32 %v690, %v686
    %694 = vset.pattern.permute.xlu0 4
    %695 = vperm.xlu0 %694, %v31
    %v696 = vpop.permute.xlu0 %695
    %v698 = vmul.f32 %v696, %v684
    %v699 = vmul.f32 %v696, %v686
    %702 = vrot.lane.b32.xlu0 %v698, 127
    %v703 = vpop.permute.xlu0 %702
    %704 = vrot.lane.b32.xlu0 %v699, 127
    %v705 = vpop.permute.xlu0 %704
    %v706 = vsel %vm79, %v703, %v705
    %v709 = vadd.f32 %v692, %v706
    %v710 = vadd.f32 %v693, %v705
    %711 = vset.pattern.permute.xlu0 5
    %712 = vperm.xlu0 %711, %v31
    %v713 = vpop.permute.xlu0 %712
    %v715 = vmul.f32 %v713, %v684
    %v716 = vmul.f32 %v713, %v686
    %719 = vrot.lane.b32.xlu0 %v715, 126
    %v720 = vpop.permute.xlu0 %719
    %721 = vrot.lane.b32.xlu0 %v716, 126
    %v722 = vpop.permute.xlu0 %721
    %v723 = vsel %vm97, %v720, %v722
    %v726 = vadd.f32 %v709, %v723
    %v727 = vadd.f32 %v710, %v722
    %v728 = vrot.slane %v726, 4
    %v729 = vadd.f32 %v726, %v728
    %v730 = vrot.slane %v729, 2
    %v731 = vadd.f32 %v729, %v730
    %v732 = vrot.slane %v731, 1
    %v733 = vadd.f32 %v731, %v732
    %v734 = vsel %vm685, %v727, 0.0
    %v735 = vrot.slane %v734, 4
    %v736 = vadd.f32 %v734, %v735
    %v737 = vrot.slane %v736, 2
    %v738 = vadd.f32 %v736, %v737
    %v739 = vrot.slane %v738, 1
    %v740 = vadd.f32 %v738, %v739
    %741 = vset.pattern.permute.xlu0 0
    %742 = vperm.xlu0 %741, %v31
    %v743 = vpop.permute.xlu0 %742
    %v745 = vadd.f32 %v733, %v743
    %v746 = vadd.f32 %v740, %v743
    %v747 = vmax.f32 %v745, 0.0
    %v748 = vmax.f32 %v746, 0.0
    %749 = vset.pattern.permute.xlu0 1
    %750 = vperm.xlu0 %749, %v31
    %v751 = vpop.permute.xlu0 %750
    %v753 = vmul.f32 %v747, %v751
    %v754 = vmul.f32 %v748, %v751
    %755 = vset.pattern.permute.xlu0 2
    %756 = vperm.xlu0 %755, %v31
    %v757 = vpop.permute.xlu0 %756
    %v759 = vadd.f32 %v753, %v757
    %v760 = vadd.f32 %v754, %v757
    %762 = vrot.lane.b32.xlu0 %v431, 127
    %v763 = vpop.permute.xlu0 %762
    %v765 = vsel %vm685, %v760, 0.0
    %v766 = vsel %vm79, %v765, %v763
    %v767 = vlaneseq
    %v768 = vshrl.u32 %v767, 7
    %v769 = vsub.s32 1, %v768
    %v770 = vrot.slane %v18, %v769
    %v771 = vlaneseq
    %v772 = vshrl.u32 %v771, 7
    %v773 = vsub.s32 3, %v772
    %v774 = vrot.slane %v18, %v773
    %v777 = vlaneseq
    %v778 = vshrl.u32 %v777, 7
    %v779 = vsub.s32 1, %v778
    %v780 = vrot.slane %v770, %v779
    %v781 = vlaneseq
    %v782 = vshrl.u32 %v781, 7
    %v783 = vsub.s32 1, %v782
    %v784 = vrot.slane %v774, %v783
    %v785 = vmul.f32 %v44, %v780
    %v786 = vmul.f32 %v44, %v784
    %v787 = vmul.f32 %v69, %v780
    %v788 = vmul.f32 %v69, %v784
    %791 = vrot.lane.b32.xlu0 %v787, 127
    %v792 = vpop.permute.xlu0 %791
    %793 = vrot.lane.b32.xlu0 %v788, 127
    %v794 = vpop.permute.xlu0 %793
    %v795 = vsel %vm79, %v792, %v794
    %v798 = vadd.f32 %v785, %v795
    %v799 = vadd.f32 %v786, %v794
    %v800 = vmul.f32 %v87, %v780
    %v801 = vmul.f32 %v87, %v784
    %804 = vrot.lane.b32.xlu0 %v800, 126
    %v805 = vpop.permute.xlu0 %804
    %806 = vrot.lane.b32.xlu0 %v801, 126
    %v807 = vpop.permute.xlu0 %806
    %v808 = vsel %vm97, %v805, %v807
    %v811 = vadd.f32 %v798, %v808
    %v812 = vadd.f32 %v799, %v807
    %v813 = vadd.f32 %v811, %v105
    %v814 = vadd.f32 %v812, %v105
    %v815 = vmax.f32 %v813, 0.0
    %v816 = vmax.f32 %v814, 0.0
    %v817 = vmul.f32 %v815, %v113
    %v818 = vmul.f32 %v816, %v113
    %v819 = vadd.f32 %v817, %v119
    %v820 = vadd.f32 %v818, %v119
    %823 = vrot.lane.b32.xlu0 %v819, 1
    %v824 = vpop.permute.xlu0 %823
    %825 = vrot.lane.b32.xlu0 %v820, 1
    %v826 = vpop.permute.xlu0 %825
    %v827 = vsel %vm129, %v824, %v826
    %v830 = vsel %vm129, -inf, %v824
    %v831 = vsel %vm134, %v827, -inf
    %v832 = vmax.f32 %v819, %v830
    %v833 = vmax.f32 %v820, %v831
    %836 = vrot.lane.b32.xlu0 %v830, 126
    %v837 = vpop.permute.xlu0 %836
    %838 = vrot.lane.b32.xlu0 %v831, 126
    %v839 = vpop.permute.xlu0 %838
    %v840 = vsel %vm97, %v837, %v839
    %v843 = vmax.f32 %v832, %v840
    %v844 = vmax.f32 %v833, %v839
    %847 = vrot.lane.b32.xlu0 %v843, 127
    %v848 = vpop.permute.xlu0 %847
    %849 = vrot.lane.b32.xlu0 %v844, 127
    %v850 = vpop.permute.xlu0 %849
    %v851 = vsel %vm79, %v848, %v850
    %854 = vrot.lane.b32.xlu0 %v843, 126
    %v855 = vpop.permute.xlu0 %854
    %856 = vrot.lane.b32.xlu0 %v844, 126
    %v857 = vpop.permute.xlu0 %856
    %v858 = vsel %vm97, %v855, %v857
    %861 = vmatprep.subr.mxu0 %v844
    %862 = vmatpush1.msra.mxu0 %v843
    %863 = vmatprep.subr.mxu0 %v850
    %864 = vmatpush1.msra.mxu0 %v851
    %865 = vmatprep.subr.mxu0 %v857
    %866 = vmatpush1.msra.mxu0 %v858
    %867 = vmatprep.subr.mxu0 0.0
    %868 = vmatpush1.msra.mxu0 0.0
    %869 = vmatprep.subr.mxu0 0.0
    %870 = vmatpush1.msra.mxu0 0.0
    %871 = vmatprep.subr.mxu0 0.0
    %872 = vmatpush1.msra.mxu0 0.0
    %873 = vmatprep.subr.mxu0 0.0
    %874 = vmatpush1.msra.mxu0 0.0
    %875 = vmatprep.subr.mxu0 0.0
    %876 = vmatpush1.msra.mxu0 0.0
    %877 = vmatprep.subr.mxu0 0.0
    %878 = vmatpush1.msra.mxu0 0.0
    %879 = vmatprep.subr.mxu0 0.0
    %880 = vmatpush1.msra.mxu0 0.0
    %881 = vmatprep.subr.mxu0 0.0
    %882 = vmatpush1.msra.mxu0 0.0
    %883 = vmatprep.subr.mxu0 0.0
    %884 = vmatpush1.msra.mxu0 0.0
    %885 = vmatprep.subr.mxu0 0.0
    %886 = vmatpush1.msra.mxu0 0.0
    %887 = vmatprep.subr.mxu0 0.0
    %888 = vmatpush1.msra.mxu0 0.0
    %889 = vmatprep.subr.mxu0 0.0
    %890 = vmatpush1.msra.mxu0 0.0
    %891 = vmatprep.subr.mxu0 0.0
    %892 = vmatpush1.msra.mxu0 0.0
    %893 = vmatprep.subr.mxu0 0.0
    %894 = vmatpush1.msra.mxu0 0.0
    %895 = vmatprep.subr.mxu0 0.0
    %896 = vmatpush1.msra.mxu0 0.0
    %897 = vmatprep.subr.mxu0 0.0
    %898 = vmatpush1.msra.mxu0 0.0
    %899 = vmatprep.subr.mxu0 0.0
    %900 = vmatpush1.msra.mxu0 0.0
    %901 = vmatprep.subr.mxu0 0.0
    %902 = vmatpush1.msra.mxu0 0.0
    %903 = vmatprep.subr.mxu0 0.0
    %904 = vmatpush1.msra.mxu0 0.0
    %905 = vmatprep.subr.mxu0 0.0
    %906 = vmatpush1.msra.mxu0 0.0
    %907 = vmatprep.subr.mxu0 0.0
    %908 = vmatpush1.msra.mxu0 0.0
    %909 = vmatprep.subr.mxu0 0.0
    %910 = vmatpush1.msra.mxu0 0.0
    %911 = vmatprep.subr.mxu0 0.0
    %912 = vmatpush1.msra.mxu0 0.0
    %913 = vmatprep.subr.mxu0 0.0
    %914 = vmatpush1.msra.mxu0 0.0
    %915 = vmatprep.subr.mxu0 0.0
    %916 = vmatpush1.msra.mxu0 0.0
    %917 = vmatprep.subr.mxu0 0.0
    %918 = vmatpush1.msra.mxu0 0.0
    %919 = vmatprep.subr.mxu0 0.0
    %920 = vmatpush1.msra.mxu0 0.0
    %921 = vmatprep.subr.mxu0 0.0
    %922 = vmatpush1.msra.mxu0 0.0
    %923 = vmatprep.subr.mxu0 0.0
    %924 = vmatpush1.msra.mxu0 0.0
    %925 = vmatprep.mubr.f32.mxu0 0.0
    %926 = vmatmul.mubr.f32.gmra.mrb[0].mxu0 %v172
    %v927 = vpop.f32.mrb[0].mxu0
    %v928 = vadd.f32 %v168, %v927
    %v929 = vpop.f32.mrb[0].mxu0
    %v930 = vadd.f32 %v168, %v929
    %931 = vdwg.mxu0
    %v932 = vmax.f32 %v928, 0.0
    %v933 = vmax.f32 %v930, 0.0
    %v934 = vmul.f32 %v932, %v249
    %v935 = vmul.f32 %v933, %v249
    %v936 = vadd.f32 %v934, %v255
    %v937 = vadd.f32 %v935, %v255
    %940 = vrot.lane.b32.xlu0 %v936, 1
    %v941 = vpop.permute.xlu0 %940
    %942 = vrot.lane.b32.xlu0 %v937, 1
    %v943 = vpop.permute.xlu0 %942
    %v944 = vsel %vm129, %v941, %v943
    %v947 = vsel %vm129, -inf, %v941
    %v948 = vsel %vm269, %v944, -inf
    %v949 = vmax.f32 %v936, %v947
    %v950 = vmax.f32 %v937, %v948
    %953 = vrot.lane.b32.xlu0 %v947, 126
    %v954 = vpop.permute.xlu0 %953
    %955 = vrot.lane.b32.xlu0 %v948, 126
    %v956 = vpop.permute.xlu0 %955
    %v957 = vsel %vm97, %v954, %v956
    %v960 = vmax.f32 %v949, %v957
    %v961 = vmax.f32 %v950, %v956
    %964 = vrot.lane.b32.xlu0 %v960, 127
    %v965 = vpop.permute.xlu0 %964
    %966 = vrot.lane.b32.xlu0 %v961, 127
    %v967 = vpop.permute.xlu0 %966
    %v968 = vsel %vm79, %v965, %v967
    %971 = vrot.lane.b32.xlu0 %v960, 126
    %v972 = vpop.permute.xlu0 %971
    %973 = vrot.lane.b32.xlu0 %v961, 126
    %v974 = vpop.permute.xlu0 %973
    %v975 = vsel %vm97, %v972, %v974
    %978 = vmatprep.subr.mxu0 %v961
    %979 = vmatpush1.msra.mxu0 %v960
    %980 = vmatprep.subr.mxu0 %v967
    %981 = vmatpush1.msra.mxu0 %v968
    %982 = vmatprep.subr.mxu0 %v974
    %983 = vmatpush1.msra.mxu0 %v975
    %984 = vmatprep.subr.mxu0 0.0
    %985 = vmatpush1.msra.mxu0 0.0
    %986 = vmatprep.subr.mxu0 0.0
    %987 = vmatpush1.msra.mxu0 0.0
    %988 = vmatprep.subr.mxu0 0.0
    %989 = vmatpush1.msra.mxu0 0.0
    %990 = vmatprep.subr.mxu0 0.0
    %991 = vmatpush1.msra.mxu0 0.0
    %992 = vmatprep.subr.mxu0 0.0
    %993 = vmatpush1.msra.mxu0 0.0
    %994 = vmatprep.subr.mxu0 0.0
    %995 = vmatpush1.msra.mxu0 0.0
    %996 = vmatprep.subr.mxu0 0.0
    %997 = vmatpush1.msra.mxu0 0.0
    %998 = vmatprep.subr.mxu0 0.0
    %999 = vmatpush1.msra.mxu0 0.0
    %1000 = vmatprep.subr.mxu0 0.0
    %1001 = vmatpush1.msra.mxu0 0.0
    %1002 = vmatprep.subr.mxu0 0.0
    %1003 = vmatpush1.msra.mxu0 0.0
    %1004 = vmatprep.subr.mxu0 0.0
    %1005 = vmatpush1.msra.mxu0 0.0
    %1006 = vmatprep.subr.mxu0 0.0
    %1007 = vmatpush1.msra.mxu0 0.0
    %1008 = vmatprep.subr.mxu0 0.0
    %1009 = vmatpush1.msra.mxu0 0.0
    %1010 = vmatprep.subr.mxu0 0.0
    %1011 = vmatpush1.msra.mxu0 0.0
    %1012 = vmatprep.subr.mxu0 0.0
    %1013 = vmatpush1.msra.mxu0 0.0
    %1014 = vmatprep.subr.mxu0 0.0
    %1015 = vmatpush1.msra.mxu0 0.0
    %1016 = vmatprep.subr.mxu0 0.0
    %1017 = vmatpush1.msra.mxu0 0.0
    %1018 = vmatprep.subr.mxu0 0.0
    %1019 = vmatpush1.msra.mxu0 0.0
    %1020 = vmatprep.subr.mxu0 0.0
    %1021 = vmatpush1.msra.mxu0 0.0
    %1022 = vmatprep.subr.mxu0 0.0
    %1023 = vmatpush1.msra.mxu0 0.0
    %1024 = vmatprep.subr.mxu0 0.0
    %1025 = vmatpush1.msra.mxu0 0.0
    %1026 = vmatprep.subr.mxu0 0.0
    %1027 = vmatpush1.msra.mxu0 0.0
    %1028 = vmatprep.subr.mxu0 0.0
    %1029 = vmatpush1.msra.mxu0 0.0
    %1030 = vmatprep.subr.mxu0 0.0
    %1031 = vmatpush1.msra.mxu0 0.0
    %1032 = vmatprep.subr.mxu0 0.0
    %1033 = vmatpush1.msra.mxu0 0.0
    %1034 = vmatprep.subr.mxu0 0.0
    %1035 = vmatpush1.msra.mxu0 0.0
    %1036 = vmatprep.subr.mxu0 0.0
    %1037 = vmatpush1.msra.mxu0 0.0
    %1038 = vmatprep.subr.mxu0 0.0
    %1039 = vmatpush1.msra.mxu0 0.0
    %1040 = vmatprep.subr.mxu0 0.0
    %1041 = vmatpush1.msra.mxu0 0.0
    %1042 = vmatprep.mubr.f32.mxu0 0.0
    %1043 = vmatmul.mubr.f32.gmra.mrb[0].mxu0 %v306
    %v1044 = vpop.f32.mrb[0].mxu0
    %v1045 = vadd.f32 %v303, %v1044
    %v1046 = vpop.f32.mrb[0].mxu0
    %v1047 = vadd.f32 %v303, %v1046
    %1048 = vdwg.mxu0
    %v1049 = vmax.f32 %v1045, 0.0
    %v1050 = vmax.f32 %v1047, 0.0
    %v1051 = vmul.f32 %v1049, %v383
    %v1052 = vmul.f32 %v1050, %v383
    %v1053 = vadd.f32 %v1051, %v389
    %v1054 = vadd.f32 %v1052, %v389
    %1057 = vrot.lane.b32.xlu0 %v1053, 1
    %v1058 = vpop.permute.xlu0 %1057
    %1059 = vrot.lane.b32.xlu0 %v1054, 1
    %v1060 = vpop.permute.xlu0 %1059
    %v1061 = vsel %vm129, %v1058, %v1060
    %v1064 = vsel %vm129, -inf, %v1058
    %v1065 = vsel %vm403, %v1061, -inf
    %v1066 = vmax.f32 %v1053, %v1064
    %v1067 = vmax.f32 %v1054, %v1065
    %1070 = vrot.lane.b32.xlu0 %v1064, 126
    %v1071 = vpop.permute.xlu0 %1070
    %1072 = vrot.lane.b32.xlu0 %v1065, 126
    %v1073 = vpop.permute.xlu0 %1072
    %v1074 = vsel %vm97, %v1071, %v1073
    %v1077 = vmax.f32 %v1066, %v1074
    %v1078 = vmax.f32 %v1067, %v1073
    %v1079 = vmul.f32 %v1077, %v19
    %v1080 = vmul.f32 %v1078, %v20
    %v1081 = vsel %vm420, %v1080, 0.0
    %v1082 = vadd.f32 %v1079, %v1081
    %1083 = vadd.xlane.f32.xlu0 %v1082
    %v1084 = vpop.xlane.xlu0 %1083
    %v1085 = vrot.slane %v1084, 4
    %v1086 = vadd.f32 %v1084, %v1085
    %v1087 = vrot.slane %v1086, 2
    %v1088 = vadd.f32 %v1086, %v1087
    %v1089 = vrot.slane %v1088, 1
    %v1090 = vadd.f32 %v1088, %v1089
    %v1091 = vadd.f32 %v1090, %v33
    %1094 = vrot.lane.b32.xlu0 %v1077, 2
    %v1095 = vpop.permute.xlu0 %1094
    %1096 = vrot.lane.b32.xlu0 %v1078, 2
    %v1097 = vpop.permute.xlu0 %1096
    %v1098 = vsel %vm438, %v1095, %v1097
    %v1101 = vsel %vm438, 0.0, %v1095
    %v1102 = vsel %vm443, %v1098, 0.0
    %1105 = vrot.lane.b32.xlu0 %v1101, 127
    %v1106 = vpop.permute.xlu0 %1105
    %1107 = vrot.lane.b32.xlu0 %v1102, 127
    %v1108 = vpop.permute.xlu0 %1107
    %v1109 = vsel %vm79, %v1106, %v1108
    %1112 = vrot.lane.b32.xlu0 %v1101, 126
    %v1113 = vpop.permute.xlu0 %1112
    %1114 = vrot.lane.b32.xlu0 %v1102, 126
    %v1115 = vpop.permute.xlu0 %1114
    %v1116 = vsel %vm97, %v1113, %v1115
    %1119 = vmatprep.subr.mxu0 %v1102
    %1120 = vmatpush1.msra.mxu0 %v1101
    %1121 = vmatprep.subr.mxu0 %v1108
    %1122 = vmatpush1.msra.mxu0 %v1109
    %1123 = vmatprep.subr.mxu0 %v1115
    %1124 = vmatpush1.msra.mxu0 %v1116
    %1125 = vmatprep.subr.mxu0 0.0
    %1126 = vmatpush1.msra.mxu0 0.0
    %1127 = vmatprep.subr.mxu0 0.0
    %1128 = vmatpush1.msra.mxu0 0.0
    %1129 = vmatprep.subr.mxu0 0.0
    %1130 = vmatpush1.msra.mxu0 0.0
    %1131 = vmatprep.subr.mxu0 0.0
    %1132 = vmatpush1.msra.mxu0 0.0
    %1133 = vmatprep.subr.mxu0 0.0
    %1134 = vmatpush1.msra.mxu0 0.0
    %1135 = vmatprep.subr.mxu0 0.0
    %1136 = vmatpush1.msra.mxu0 0.0
    %1137 = vmatprep.subr.mxu0 0.0
    %1138 = vmatpush1.msra.mxu0 0.0
    %1139 = vmatprep.subr.mxu0 0.0
    %1140 = vmatpush1.msra.mxu0 0.0
    %1141 = vmatprep.subr.mxu0 0.0
    %1142 = vmatpush1.msra.mxu0 0.0
    %1143 = vmatprep.subr.mxu0 0.0
    %1144 = vmatpush1.msra.mxu0 0.0
    %1145 = vmatprep.subr.mxu0 0.0
    %1146 = vmatpush1.msra.mxu0 0.0
    %1147 = vmatprep.subr.mxu0 0.0
    %1148 = vmatpush1.msra.mxu0 0.0
    %1149 = vmatprep.subr.mxu0 0.0
    %1150 = vmatpush1.msra.mxu0 0.0
    %1151 = vmatprep.subr.mxu0 0.0
    %1152 = vmatpush1.msra.mxu0 0.0
    %1153 = vmatprep.subr.mxu0 0.0
    %1154 = vmatpush1.msra.mxu0 0.0
    %1155 = vmatprep.subr.mxu0 0.0
    %1156 = vmatpush1.msra.mxu0 0.0
    %1157 = vmatprep.subr.mxu0 0.0
    %1158 = vmatpush1.msra.mxu0 0.0
    %1159 = vmatprep.subr.mxu0 0.0
    %1160 = vmatpush1.msra.mxu0 0.0
    %1161 = vmatprep.subr.mxu0 0.0
    %1162 = vmatpush1.msra.mxu0 0.0
    %1163 = vmatprep.subr.mxu0 0.0
    %1164 = vmatpush1.msra.mxu0 0.0
    %1165 = vmatprep.subr.mxu0 0.0
    %1166 = vmatpush1.msra.mxu0 0.0
    %1167 = vmatprep.subr.mxu0 0.0
    %1168 = vmatpush1.msra.mxu0 0.0
    %1169 = vmatprep.subr.mxu0 0.0
    %1170 = vmatpush1.msra.mxu0 0.0
    %1171 = vmatprep.subr.mxu0 0.0
    %1172 = vmatpush1.msra.mxu0 0.0
    %1173 = vmatprep.subr.mxu0 0.0
    %1174 = vmatpush1.msra.mxu0 0.0
    %1175 = vmatprep.subr.mxu0 0.0
    %1176 = vmatpush1.msra.mxu0 0.0
    %1177 = vmatprep.subr.mxu0 0.0
    %1178 = vmatpush1.msra.mxu0 0.0
    %1179 = vmatprep.subr.mxu0 0.0
    %1180 = vmatpush1.msra.mxu0 0.0
    %1181 = vmatprep.subr.mxu0 0.0
    %1182 = vmatpush1.msra.mxu0 0.0
    %1183 = vmatprep.mubr.f32.mxu0 0.0
    %1184 = vmatmul.mubr.f32.gmra.mrb[0].mxu0 %v467
    %v1185 = vpop.f32.mrb[0].mxu0
    %v1186 = vadd.f32 %v464, %v1185
    %v1187 = vpop.f32.mrb[0].mxu0
    %v1188 = vadd.f32 %v464, %v1187
    %1189 = vdwg.mxu0
    %v1190 = vmax.f32 %v1186, 0.0
    %v1191 = vmax.f32 %v1188, 0.0
    %v1192 = vmul.f32 %v1190, %v544
    %v1193 = vmul.f32 %v1191, %v544
    %v1194 = vadd.f32 %v1192, %v550
    %v1195 = vadd.f32 %v1193, %v550
    %1198 = vrot.lane.b32.xlu0 %v1194, 2
    %v1199 = vpop.permute.xlu0 %1198
    %1200 = vrot.lane.b32.xlu0 %v1195, 2
    %v1201 = vpop.permute.xlu0 %1200
    %v1202 = vsel %vm438, %v1199, %v1201
    %v1205 = vsel %vm438, 0.0, %v1199
    %v1206 = vsel %vm564, %v1202, 0.0
    %1209 = vrot.lane.b32.xlu0 %v1205, 127
    %v1210 = vpop.permute.xlu0 %1209
    %1211 = vrot.lane.b32.xlu0 %v1206, 127
    %v1212 = vpop.permute.xlu0 %1211
    %v1213 = vsel %vm79, %v1210, %v1212
    %1216 = vrot.lane.b32.xlu0 %v1205, 126
    %v1217 = vpop.permute.xlu0 %1216
    %1218 = vrot.lane.b32.xlu0 %v1206, 126
    %v1219 = vpop.permute.xlu0 %1218
    %v1220 = vsel %vm97, %v1217, %v1219
    %1223 = vmatprep.subr.mxu0 %v1206
    %1224 = vmatpush1.msra.mxu0 %v1205
    %1225 = vmatprep.subr.mxu0 %v1212
    %1226 = vmatpush1.msra.mxu0 %v1213
    %1227 = vmatprep.subr.mxu0 %v1219
    %1228 = vmatpush1.msra.mxu0 %v1220
    %1229 = vmatprep.subr.mxu0 0.0
    %1230 = vmatpush1.msra.mxu0 0.0
    %1231 = vmatprep.subr.mxu0 0.0
    %1232 = vmatpush1.msra.mxu0 0.0
    %1233 = vmatprep.subr.mxu0 0.0
    %1234 = vmatpush1.msra.mxu0 0.0
    %1235 = vmatprep.subr.mxu0 0.0
    %1236 = vmatpush1.msra.mxu0 0.0
    %1237 = vmatprep.subr.mxu0 0.0
    %1238 = vmatpush1.msra.mxu0 0.0
    %1239 = vmatprep.subr.mxu0 0.0
    %1240 = vmatpush1.msra.mxu0 0.0
    %1241 = vmatprep.subr.mxu0 0.0
    %1242 = vmatpush1.msra.mxu0 0.0
    %1243 = vmatprep.subr.mxu0 0.0
    %1244 = vmatpush1.msra.mxu0 0.0
    %1245 = vmatprep.subr.mxu0 0.0
    %1246 = vmatpush1.msra.mxu0 0.0
    %1247 = vmatprep.subr.mxu0 0.0
    %1248 = vmatpush1.msra.mxu0 0.0
    %1249 = vmatprep.subr.mxu0 0.0
    %1250 = vmatpush1.msra.mxu0 0.0
    %1251 = vmatprep.subr.mxu0 0.0
    %1252 = vmatpush1.msra.mxu0 0.0
    %1253 = vmatprep.subr.mxu0 0.0
    %1254 = vmatpush1.msra.mxu0 0.0
    %1255 = vmatprep.subr.mxu0 0.0
    %1256 = vmatpush1.msra.mxu0 0.0
    %1257 = vmatprep.subr.mxu0 0.0
    %1258 = vmatpush1.msra.mxu0 0.0
    %1259 = vmatprep.subr.mxu0 0.0
    %1260 = vmatpush1.msra.mxu0 0.0
    %1261 = vmatprep.subr.mxu0 0.0
    %1262 = vmatpush1.msra.mxu0 0.0
    %1263 = vmatprep.subr.mxu0 0.0
    %1264 = vmatpush1.msra.mxu0 0.0
    %1265 = vmatprep.subr.mxu0 0.0
    %1266 = vmatpush1.msra.mxu0 0.0
    %1267 = vmatprep.subr.mxu0 0.0
    %1268 = vmatpush1.msra.mxu0 0.0
    %1269 = vmatprep.subr.mxu0 0.0
    %1270 = vmatpush1.msra.mxu0 0.0
    %1271 = vmatprep.subr.mxu0 0.0
    %1272 = vmatpush1.msra.mxu0 0.0
    %1273 = vmatprep.subr.mxu0 0.0
    %1274 = vmatpush1.msra.mxu0 0.0
    %1275 = vmatprep.subr.mxu0 0.0
    %1276 = vmatpush1.msra.mxu0 0.0
    %1277 = vmatprep.subr.mxu0 0.0
    %1278 = vmatpush1.msra.mxu0 0.0
    %1279 = vmatprep.subr.mxu0 0.0
    %1280 = vmatpush1.msra.mxu0 0.0
    %1281 = vmatprep.subr.mxu0 0.0
    %1282 = vmatpush1.msra.mxu0 0.0
    %1283 = vmatprep.subr.mxu0 0.0
    %1284 = vmatpush1.msra.mxu0 0.0
    %1285 = vmatprep.subr.mxu0 0.0
    %1286 = vmatpush1.msra.mxu0 0.0
    %1287 = vmatprep.mubr.f32.mxu0 0.0
    %1288 = vmatmul.mubr.f32.gmra.mrb[0].mxu0 %v588
    %v1289 = vpop.f32.mrb[0].mxu0
    %v1290 = vadd.f32 %v585, %v1289
    %v1291 = vpop.f32.mrb[0].mxu0
    %v1292 = vadd.f32 %v585, %v1291
    %1293 = vdwg.mxu0
    %v1294 = vmax.f32 %v1290, 0.0
    %v1295 = vmax.f32 %v1292, 0.0
    %v1296 = vmul.f32 %v1294, %v665
    %v1297 = vmul.f32 %v1295, %v665
    %v1298 = vadd.f32 %v1296, %v671
    %v1299 = vadd.f32 %v1297, %v671
    %1302 = vrot.lane.b32.xlu0 %v1298, 2
    %v1303 = vpop.permute.xlu0 %1302
    %1304 = vrot.lane.b32.xlu0 %v1299, 2
    %v1305 = vpop.permute.xlu0 %1304
    %v1306 = vsel %vm438, %v1303, %v1305
    %v1309 = vsel %vm438, 0.0, %v1303
    %v1310 = vsel %vm685, %v1306, 0.0
    %v1311 = vmul.f32 %v690, %v1309
    %v1312 = vmul.f32 %v690, %v1310
    %v1313 = vmul.f32 %v696, %v1309
    %v1314 = vmul.f32 %v696, %v1310
    %1317 = vrot.lane.b32.xlu0 %v1313, 127
    %v1318 = vpop.permute.xlu0 %1317
    %1319 = vrot.lane.b32.xlu0 %v1314, 127
    %v1320 = vpop.permute.xlu0 %1319
    %v1321 = vsel %vm79, %v1318, %v1320
    %v1324 = vadd.f32 %v1311, %v1321
    %v1325 = vadd.f32 %v1312, %v1320
    %v1326 = vmul.f32 %v713, %v1309
    %v1327 = vmul.f32 %v713, %v1310
    %1330 = vrot.lane.b32.xlu0 %v1326, 126
    %v1331 = vpop.permute.xlu0 %1330
    %1332 = vrot.lane.b32.xlu0 %v1327, 126
    %v1333 = vpop.permute.xlu0 %1332
    %v1334 = vsel %vm97, %v1331, %v1333
    %v1337 = vadd.f32 %v1324, %v1334
    %v1338 = vadd.f32 %v1325, %v1333
    %v1339 = vrot.slane %v1337, 4
    %v1340 = vadd.f32 %v1337, %v1339
    %v1341 = vrot.slane %v1340, 2
    %v1342 = vadd.f32 %v1340, %v1341
    %v1343 = vrot.slane %v1342, 1
    %v1344 = vadd.f32 %v1342, %v1343
    %v1345 = vsel %vm685, %v1338, 0.0
    %v1346 = vrot.slane %v1345, 4
    %v1347 = vadd.f32 %v1345, %v1346
    %v1348 = vrot.slane %v1347, 2
    %v1349 = vadd.f32 %v1347, %v1348
    %v1350 = vrot.slane %v1349, 1
    %v1351 = vadd.f32 %v1349, %v1350
    %v1352 = vadd.f32 %v1344, %v743
    %v1353 = vadd.f32 %v1351, %v743
    %v1354 = vmax.f32 %v1352, 0.0
    %v1355 = vmax.f32 %v1353, 0.0
    %v1356 = vmul.f32 %v1354, %v751
    %v1357 = vmul.f32 %v1355, %v751
    %v1358 = vadd.f32 %v1356, %v757
    %v1359 = vadd.f32 %v1357, %v757
    %1361 = vrot.lane.b32.xlu0 %v1091, 127
    %v1362 = vpop.permute.xlu0 %1361
    %v1364 = vsel %vm685, %v1359, 0.0
    %v1365 = vsel %vm79, %v1364, %v1362
    %v1368 = vrot.slane %v1358, 7
    %v1369 = vrot.slane %v1365, 7
    %vm1372 = vcmask 1040384
    %v1373 = vsel %vm1372, %v759, %v1368
    %v1374 = vsel %vm1372, %v766, %v1369
    %v1377 = vcombine.low %v1373, %v1374
    %v1379 = vunpack.c.l.s4 1983009808
    %v1380 = vunpack.c.0.s8 %v1379
    %v1381 = vlaneseq
    %v1382 = vshrl.u32 %v1381, 7
    %v1383 = vsub.s32 %v1380, %v1382
    %v1384 = vrot.slane %v1377, %v1383
    %1386 = vst [vmem:[#allocation2] sm:$0xf] %v1384
    // Predicated region
    $region18: #{tpu_custom_call.1} parent=1 // pred_check
      _
    $region19: #{tpu_custom_call.1} parent=1 // pred_check_branch
      %1388 = sbr.rel (0) target = $region21
    $region20: #{tpu_custom_call.1} parent=1 // pred_region
      %s1390 = ssub.s32 64, 64
      %1391 = vsyncadd [#allocation3], %s1390
      %s1393 = sshll.u32 [#allocation2], 4
      %s1394 = int_to_ptr.vmem [resolvable:$true] %s1393
      %1396 = dma.vmem_to_hbm [thread:$0]  %s1394, 64, %s4, [#allocation3]
    $region21: #{tpu_custom_call.1} parent=1 // pred_fallthru
      _
    // Predicated region
    $region22: #{tpu_custom_call.1} parent=1 // pred_check
      _
    $region23: #{tpu_custom_call.1} parent=1 // pred_check_branch
      %1398 = sbr.rel (0) target = $region25
    $region24: #{tpu_custom_call.1} parent=1 // pred_region
      %1399 = dma.done [#allocation3], 64
    $region25: #{tpu_custom_call.1} parent=1 // pred_fallthru
      _
    %1400 = vsyncpa [#allocation3], 1

</llo_original>
